<compile_context>
chip_gen: v5e
topology: v5e:2x2
jax: 0.10.0
libtpu: 0.0.40
codegen_flags: <defaults>
</compile_context>

<pallas_src>
import functools
import math

import jax
import jax.numpy as jnp
import numpy as np
from jax.experimental import pallas as pl
from jax.experimental.pallas import tpu as pltpu

_NEG_SLOPE = 0.01  # nn.LeakyReLU default negative_slope


def _leaky_relu(h):
    return jnp.maximum(h, 0.0) + _NEG_SLOPE * jnp.minimum(h, 0.0)


def _round_up(n, m):
    return ((n + m - 1) // m) * m


# ---------------------------------------------------------------------------
# Kernel: one batch tile (batch on lanes), all L coupling layers unrolled.
# ---------------------------------------------------------------------------
def _realnvp_kernel(xT_ref, mask_ref, omask_ref,
                    W1T_ref, b1_ref, W2T_ref, b2_ref, W3T_ref, b3_ref,
                    logp_ref):
    z = xT_ref[...]                         # [D, TB] f32, batch on the lane axis
    D = z.shape[0]
    L = mask_ref.shape[0]

    s_acc = jnp.zeros_like(z)               # deferred log-det accumulator (f32)

    # backward_p: iterate coupling layers in reverse (statically unrolled).
    for i in reversed(range(L)):
        m = mask_ref[i]                     # [D, 1]
        om = omask_ref[i]                   # [D, 1]  (= 1 - m, precomputed)
        z_ = m * z                          # [D, TB]

        # Fused s/t MLP (block-diagonal, built in the wrapper): 3 MXU matmuls,
        # all f32 with f32 accumulation, operands already transposed.
        h = jnp.dot(W1T_ref[i], z_, preferred_element_type=jnp.float32) + b1_ref[i]
        h = _leaky_relu(h)                  # [2H, TB]
        h = jnp.dot(W2T_ref[i], h, preferred_element_type=jnp.float32) + b2_ref[i]
        h = _leaky_relu(h)
        o = jnp.dot(W3T_ref[i], h, preferred_element_type=jnp.float32) + b3_ref[i]  # [2D, TB]

        # Split at row D: a sublane/tile-boundary split (free), not a lane slice.
        s = jnp.tanh(o[:D, :]) * om         # masked s (used for both exp and log-det)
        t = o[D:, :]                        # t needs no mask: update multiplies by (1-m)

        z = om * (z - t) * jnp.exp(-s) + z_
        s_acc = s_acc + s                   # lane-parallel VPU add; reduce once at end

    # Prior (standard MVN) log_prob + log-det, fused into one cross-sublane reduction.
    logp_ref[...] = (jnp.sum(-0.5 * z * z - s_acc, axis=0, keepdims=True)
                     - 0.5 * D * math.log(2.0 * math.pi))          # [1, TB]


# ---------------------------------------------------------------------------
# Wrapper: batch on lanes, lane-dense output, resident weights, small even grid.
# ---------------------------------------------------------------------------
def realnvp_log_prob(x, mask, fused_t_params, *, interpret=False):
    """fused_t_params = (W1T[L,2H,D], b1T[L,2H,1], W2T[L,2H,2H], b2T[L,2H,1],
                         W3T[L,2D,2H], b3T[L,2D,1])  -- all f32, pre-transposed."""
    B, D = x.shape
    L = mask.shape[0]
    W1T, b1T, W2T, b2T, W3T, b3T = fused_t_params
    H = W1T.shape[1] // 2

    LANE = 128
    # Tile selection: one fat tile for tiny batches; otherwise an even number of
    # lane-aligned tiles (>=2) so the "parallel" batch axis shards across both v7x
    # TensorCores, while keeping grid steps few on single-TC v5e/v6e.
    if B <= LANE:
        ntiles = 1
    else:
        ntiles = max(2, -(-B // 4096))
        if ntiles % 2:
            ntiles += 1
    TB = _round_up(-(-B // ntiles), LANE)
    Bp = TB * ntiles

    # Batch-on-lanes layout: pad batch, then transpose (wrapper-side layout plumbing).
    xT = jnp.pad(x.astype(jnp.float32), ((0, Bp - B), (0, 0))).T     # [D, Bp]
    maskT = mask.astype(jnp.float32)[:, :, None]                     # [L, D, 1]
    omaskT = (1.0 - mask.astype(jnp.float32))[:, :, None]            # [L, D, 1]

    resident = lambda b: (0, 0, 0)   # masks/weights: same block every step -> no re-DMA

    # Advisory cost estimate for XLA scheduling around the custom call.
    flops = 2 * Bp * L * (2 * H * D + (2 * H) * (2 * H) + (2 * H) * (2 * D))
    transcendentals = 2 * Bp * L * D                                  # tanh + exp per layer
    bytes_accessed = int(
        sum(a.size * a.dtype.itemsize
            for a in (xT, maskT, omaskT, W1T, b1T, W2T, b2T, W3T, b3T))
        + Bp * 4)

    logp = pl.pallas_call(
        _realnvp_kernel,
        out_shape=jax.ShapeDtypeStruct((1, Bp), jnp.float32),         # lane-dense logp
        grid=(ntiles,),
        in_specs=[
            pl.BlockSpec((D, TB), lambda b: (0, b)),                  # x^T tile (pipelined)
            pl.BlockSpec((L, D, 1), resident),                        # mask
            pl.BlockSpec((L, D, 1), resident),                        # 1 - mask
            pl.BlockSpec((L, 2 * H, D), resident),                    # fused W1^T
            pl.BlockSpec((L, 2 * H, 1), resident),                    # fused b1
            pl.BlockSpec((L, 2 * H, 2 * H), resident),                # fused W2^T (block-diag)
            pl.BlockSpec((L, 2 * H, 1), resident),                    # fused b2
            pl.BlockSpec((L, 2 * D, 2 * H), resident),                # fused W3^T (block-diag)
            pl.BlockSpec((L, 2 * D, 1), resident),                    # fused b3
        ],
        out_specs=pl.BlockSpec((1, TB), lambda b: (0, b)),
        compiler_params=pltpu.CompilerParams(
            dimension_semantics=("parallel",),     # batch axis shards across v7x cores
        ),
        cost_estimate=pl.CostEstimate(flops=flops,
                                      transcendentals=transcendentals,
                                      bytes_accessed=bytes_accessed),
        interpret=interpret,
    )(xT, maskT, omaskT, W1T, b1T, W2T, b2T, W3T, b3T)

    return logp[0, :B]


# ---------------------------------------------------------------------------
# Parameter construction (deterministic) + s/t fusion into a block-diagonal
# MLP, pre-transposed for the batch-on-lanes kernel layout.
# ---------------------------------------------------------------------------
def make_params(key, L, inp, hid, out, gain=0.01, bias_scale=0.05):
    ks = jax.random.split(key, 12)

    def xavier(k, shape):
        fan_in, fan_out = shape[-2], shape[-1]
        lim = gain * math.sqrt(6.0 / (fan_in + fan_out))
        return jax.random.uniform(k, shape, jnp.float32, -lim, lim)

    def bias(k, shape):
        return jax.random.uniform(k, shape, jnp.float32, -bias_scale, bias_scale)

    sW1 = xavier(ks[0], (L, inp, hid)); sb1 = bias(ks[1], (L, hid))
    sW2 = xavier(ks[2], (L, hid, hid)); sb2 = bias(ks[3], (L, hid))
    sW3 = xavier(ks[4], (L, hid, out)); sb3 = bias(ks[5], (L, out))
    tW1 = xavier(ks[6], (L, inp, hid)); tb1 = bias(ks[7], (L, hid))
    tW2 = xavier(ks[8], (L, hid, hid)); tb2 = bias(ks[9], (L, hid))
    tW3 = xavier(ks[10], (L, hid, out)); tb3 = bias(ks[11], (L, out))
    return (sW1, sb1, sW2, sb2, sW3, sb3, tW1, tb1, tW2, tb2, tW3, tb3)


def fuse_and_transpose_params(params):
    """Fuse s-net and t-net into one block-diagonal MLP per layer (6 -> 3 matmuls)
    and transpose every operand for the h^T = W^T @ z^T kernel orientation."""
    (sW1, sb1, sW2, sb2, sW3, sb3, tW1, tb1, tW2, tb2, tW3, tb3) = params
    L, D, H = sW1.shape
    O = sW3.shape[-1]                      # = D here

    W1 = jnp.concatenate([sW1, tW1], axis=-1)                               # [L, D, 2H]
    W2 = (jnp.zeros((L, 2 * H, 2 * H), jnp.float32)
          .at[:, :H, :H].set(sW2).at[:, H:, H:].set(tW2))                   # [L, 2H, 2H]
    W3 = (jnp.zeros((L, 2 * H, 2 * O), jnp.float32)
          .at[:, :H, :O].set(sW3).at[:, H:, O:].set(tW3))                   # [L, 2H, 2D]
    b1 = jnp.concatenate([sb1, tb1], axis=-1)                               # [L, 2H]
    b2 = jnp.concatenate([sb2, tb2], axis=-1)                               # [L, 2H]
    b3 = jnp.concatenate([sb3, tb3], axis=-1)                               # [L, 2D]

    return (jnp.swapaxes(W1, 1, 2), b1[:, :, None],    # W1T [L,2H,D],  b1T [L,2H,1]
            jnp.swapaxes(W2, 1, 2), b2[:, :, None],    # W2T [L,2H,2H], b2T [L,2H,1]
            jnp.swapaxes(W3, 1, 2), b3[:, :, None])    # W3T [L,2D,2H], b3T [L,2D,1]


# ---------------------------------------------------------------------------
# Pure-JAX f32 reference (mirrors PyTorch backward_p + MVN prior.log_prob).
# ---------------------------------------------------------------------------
def _mlp_ref(x, W1, b1, W2, b2, W3, b3, final_tanh):
    h = _leaky_relu(x @ W1 + b1)
    h = _leaky_relu(h @ W2 + b2)
    o = h @ W3 + b3
    return jnp.tanh(o) if final_tanh else o


def reference_log_prob(x, mask, params):
    (sW1, sb1, sW2, sb2, sW3, sb3, tW1, tb1, tW2, tb2, tW3, tb3) = params
    L, D = mask.shape
    z = x
    log_det_j = jnp.zeros((x.shape[0],), jnp.float32)
    for i in reversed(range(L)):
        m = mask[i]
        z_ = m * z
        s = _mlp_ref(z_, sW1[i], sb1[i], sW2[i], sb2[i], sW3[i], sb3[i], True) * (1 - m)
        t = _mlp_ref(z_, tW1[i], tb1[i], tW2[i], tb2[i], tW3[i], tb3[i], False) * (1 - m)
        z = (1 - m) * (z - t) * jnp.exp(-s) + z_
        log_det_j = log_det_j - jnp.sum(s, axis=1)
    prior_lp = -0.5 * jnp.sum(z * z, axis=1) - 0.5 * D * math.log(2.0 * math.pi)
    return z, prior_lp + log_det_j


if __name__ == "__main__":
    # batch, feature dim, hidden, number of coupling layers
    B, D, H, L = 256, 8, 32, 4

    key = jax.random.PRNGKey(0)
    kx, kp = jax.random.split(key)

    x = jax.random.normal(kx, (B, D), jnp.float32)

    # alternating checkerboard masks over the feature dim
    base = (jnp.arange(D) % 2).astype(jnp.float32)
    mask = jnp.stack([base if (i % 2 == 0) else 1.0 - base for i in range(L)], axis=0)

    params = make_params(kp, L, D, H, D)
    fused_t = fuse_and_transpose_params(params)

    run = jax.jit(functools.partial(realnvp_log_prob))
    logp = run(x, mask, fused_t)
    jax.block_until_ready(logp)

    _, logp_ref = reference_log_prob(x, mask, params)
    assert logp.shape == (B,)
    assert np.allclose(np.asarray(logp), np.asarray(logp_ref), rtol=1e-3, atol=2e-2), \
        np.max(np.abs(np.asarray(logp) - np.asarray(logp_ref)))

    print("KERNEL_OK")
</pallas_src>

<mosaic_0001>
module attributes {stable_mosaic.version = 11 : i64} {
  func.func @_realnvp_kernel(%arg0: i32, %arg1: memref<8x128xf32, #tpu.memory_space<vmem>>, %arg2: memref<4x8x1xf32, #tpu.memory_space<vmem>>, %arg3: memref<4x8x1xf32, #tpu.memory_space<vmem>>, %arg4: memref<4x64x8xf32, #tpu.memory_space<vmem>>, %arg5: memref<4x64x1xf32, #tpu.memory_space<vmem>>, %arg6: memref<4x64x64xf32, #tpu.memory_space<vmem>>, %arg7: memref<4x64x1xf32, #tpu.memory_space<vmem>>, %arg8: memref<4x16x64xf32, #tpu.memory_space<vmem>>, %arg9: memref<4x16x1xf32, #tpu.memory_space<vmem>>, %arg10: memref<1x128xf32, #tpu.memory_space<vmem>>) attributes {dimension_semantics = [#tpu.dimension_semantics<parallel>], iteration_bounds = array<i64: 2>, scalar_prefetch = 0 : i64, scratch_operands = 0 : i64, tpu.core_type = #tpu.core_type<tc>, window_params = [{transform_indices = @transform_0, window_bounds = array<i64: 8, 128>}, {pipeline_mode = #tpu.pipeline_mode<synchronous>, transform_indices = @transform_1, window_bounds = array<i64: 4, 8, 1>}, {pipeline_mode = #tpu.pipeline_mode<synchronous>, transform_indices = @transform_2, window_bounds = array<i64: 4, 8, 1>}, {pipeline_mode = #tpu.pipeline_mode<synchronous>, transform_indices = @transform_3, window_bounds = array<i64: 4, 64, 8>}, {pipeline_mode = #tpu.pipeline_mode<synchronous>, transform_indices = @transform_4, window_bounds = array<i64: 4, 64, 1>}, {pipeline_mode = #tpu.pipeline_mode<synchronous>, transform_indices = @transform_5, window_bounds = array<i64: 4, 64, 64>}, {pipeline_mode = #tpu.pipeline_mode<synchronous>, transform_indices = @transform_6, window_bounds = array<i64: 4, 64, 1>}, {pipeline_mode = #tpu.pipeline_mode<synchronous>, transform_indices = @transform_7, window_bounds = array<i64: 4, 16, 64>}, {pipeline_mode = #tpu.pipeline_mode<synchronous>, transform_indices = @transform_8, window_bounds = array<i64: 4, 16, 1>}, {transform_indices = @transform_9, window_bounds = array<i64: 1, 128>}]} {
    %c0 = arith.constant 0 : index
    %c0_0 = arith.constant 0 : index
    %0 = vector.load %arg1[%c0, %c0_0] : memref<8x128xf32, #tpu.memory_space<vmem>>, vector<8x128xf32>
    %cst = arith.constant 0.000000e+00 : f32
    %1 = vector.broadcast %cst : f32 to vector<8x128xf32>
    %c3 = arith.constant 3 : index
    %c0_1 = arith.constant 0 : index
    %c0_2 = arith.constant 0 : index
    %2 = vector.load %arg2[%c3, %c0_1, %c0_2] : memref<4x8x1xf32, #tpu.memory_space<vmem>>, vector<1x8x1xf32>
    %3 = vector.shape_cast %2 : vector<1x8x1xf32> to vector<8x1xf32>
    %c3_3 = arith.constant 3 : index
    %c0_4 = arith.constant 0 : index
    %c0_5 = arith.constant 0 : index
    %4 = vector.load %arg3[%c3_3, %c0_4, %c0_5] : memref<4x8x1xf32, #tpu.memory_space<vmem>>, vector<1x8x1xf32>
    %5 = vector.shape_cast %4 : vector<1x8x1xf32> to vector<8x1xf32>
    %6 = vector.broadcast %3 : vector<8x1xf32> to vector<8x128xf32>
    %7 = arith.mulf %6, %0 : vector<8x128xf32>
    %c3_6 = arith.constant 3 : index
    %c0_7 = arith.constant 0 : index
    %c0_8 = arith.constant 0 : index
    %8 = vector.load %arg4[%c3_6, %c0_7, %c0_8] : memref<4x64x8xf32, #tpu.memory_space<vmem>>, vector<1x64x8xf32>
    %9 = vector.shape_cast %8 : vector<1x64x8xf32> to vector<64x8xf32>
    %cst_9 = arith.constant dense<0.000000e+00> : vector<64x128xf32>
    %10 = tpu.matmul %9, %7, %cst_9 {dimension_numbers = #tpu.dot_dimension_numbers<[1], [0], [0], [1], [0, 0, 1, 1], [], []>} : vector<64x8xf32>, vector<8x128xf32>, vector<64x128xf32> -> vector<64x128xf32>
    %c3_10 = arith.constant 3 : index
    %c0_11 = arith.constant 0 : index
    %c0_12 = arith.constant 0 : index
    %11 = vector.load %arg5[%c3_10, %c0_11, %c0_12] : memref<4x64x1xf32, #tpu.memory_space<vmem>>, vector<1x64x1xf32>
    %12 = vector.shape_cast %11 : vector<1x64x1xf32> to vector<64x1xf32>
    %13 = vector.broadcast %12 : vector<64x1xf32> to vector<64x128xf32>
    %14 = arith.addf %10, %13 : vector<64x128xf32>
    %cst_13 = arith.constant 0.000000e+00 : f32
    %15 = vector.broadcast %cst_13 : f32 to vector<64x128xf32>
    %16 = arith.maximumf %14, %15 : vector<64x128xf32>
    %cst_14 = arith.constant 0.000000e+00 : f32
    %17 = vector.broadcast %cst_14 : f32 to vector<64x128xf32>
    %18 = arith.minimumf %14, %17 : vector<64x128xf32>
    %cst_15 = arith.constant 0.00999999977 : f32
    %19 = vector.broadcast %cst_15 : f32 to vector<64x128xf32>
    %20 = arith.mulf %19, %18 : vector<64x128xf32>
    %21 = arith.addf %16, %20 : vector<64x128xf32>
    %c3_16 = arith.constant 3 : index
    %c0_17 = arith.constant 0 : index
    %c0_18 = arith.constant 0 : index
    %22 = vector.load %arg6[%c3_16, %c0_17, %c0_18] : memref<4x64x64xf32, #tpu.memory_space<vmem>>, vector<1x64x64xf32>
    %23 = vector.shape_cast %22 : vector<1x64x64xf32> to vector<64x64xf32>
    %cst_19 = arith.constant dense<0.000000e+00> : vector<64x128xf32>
    %24 = tpu.matmul %23, %21, %cst_19 {dimension_numbers = #tpu.dot_dimension_numbers<[1], [0], [0], [1], [0, 0, 1, 1], [], []>} : vector<64x64xf32>, vector<64x128xf32>, vector<64x128xf32> -> vector<64x128xf32>
    %c3_20 = arith.constant 3 : index
    %c0_21 = arith.constant 0 : index
    %c0_22 = arith.constant 0 : index
    %25 = vector.load %arg7[%c3_20, %c0_21, %c0_22] : memref<4x64x1xf32, #tpu.memory_space<vmem>>, vector<1x64x1xf32>
    %26 = vector.shape_cast %25 : vector<1x64x1xf32> to vector<64x1xf32>
    %27 = vector.broadcast %26 : vector<64x1xf32> to vector<64x128xf32>
    %28 = arith.addf %24, %27 : vector<64x128xf32>
    %cst_23 = arith.constant 0.000000e+00 : f32
    %29 = vector.broadcast %cst_23 : f32 to vector<64x128xf32>
    %30 = arith.maximumf %28, %29 : vector<64x128xf32>
    %cst_24 = arith.constant 0.000000e+00 : f32
    %31 = vector.broadcast %cst_24 : f32 to vector<64x128xf32>
    %32 = arith.minimumf %28, %31 : vector<64x128xf32>
    %cst_25 = arith.constant 0.00999999977 : f32
    %33 = vector.broadcast %cst_25 : f32 to vector<64x128xf32>
    %34 = arith.mulf %33, %32 : vector<64x128xf32>
    %35 = arith.addf %30, %34 : vector<64x128xf32>
    %c3_26 = arith.constant 3 : index
    %c0_27 = arith.constant 0 : index
    %c0_28 = arith.constant 0 : index
    %36 = vector.load %arg8[%c3_26, %c0_27, %c0_28] : memref<4x16x64xf32, #tpu.memory_space<vmem>>, vector<1x16x64xf32>
    %37 = vector.shape_cast %36 : vector<1x16x64xf32> to vector<16x64xf32>
    %cst_29 = arith.constant dense<0.000000e+00> : vector<16x128xf32>
    %38 = tpu.matmul %37, %35, %cst_29 {dimension_numbers = #tpu.dot_dimension_numbers<[1], [0], [0], [1], [0, 0, 1, 1], [], []>} : vector<16x64xf32>, vector<64x128xf32>, vector<16x128xf32> -> vector<16x128xf32>
    %c3_30 = arith.constant 3 : index
    %c0_31 = arith.constant 0 : index
    %c0_32 = arith.constant 0 : index
    %39 = vector.load %arg9[%c3_30, %c0_31, %c0_32] : memref<4x16x1xf32, #tpu.memory_space<vmem>>, vector<1x16x1xf32>
    %40 = vector.shape_cast %39 : vector<1x16x1xf32> to vector<16x1xf32>
    %41 = vector.broadcast %40 : vector<16x1xf32> to vector<16x128xf32>
    %42 = arith.addf %38, %41 : vector<16x128xf32>
    %43 = vector.extract_strided_slice %42 {offsets = [0, 0], sizes = [8, 128], strides = [1, 1]} : vector<16x128xf32> to vector<8x128xf32>
    %44 = math.tanh %43 : vector<8x128xf32>
    %45 = vector.broadcast %5 : vector<8x1xf32> to vector<8x128xf32>
    %46 = arith.mulf %44, %45 : vector<8x128xf32>
    %47 = vector.extract_strided_slice %42 {offsets = [8, 0], sizes = [8, 128], strides = [1, 1]} : vector<16x128xf32> to vector<8x128xf32>
    %48 = arith.subf %0, %47 : vector<8x128xf32>
    %49 = vector.broadcast %5 : vector<8x1xf32> to vector<8x128xf32>
    %50 = arith.mulf %49, %48 : vector<8x128xf32>
    %cst_33 = arith.constant 0.000000e+00 : f32
    %51 = vector.broadcast %cst_33 : f32 to vector<8x128xf32>
    %52 = arith.subf %51, %46 : vector<8x128xf32>
    %53 = math.exp %52 : vector<8x128xf32>
    %54 = arith.mulf %50, %53 : vector<8x128xf32>
    %55 = arith.addf %54, %7 : vector<8x128xf32>
    %56 = arith.addf %1, %46 : vector<8x128xf32>
    %c2 = arith.constant 2 : index
    %c0_34 = arith.constant 0 : index
    %c0_35 = arith.constant 0 : index
    %57 = vector.load %arg2[%c2, %c0_34, %c0_35] : memref<4x8x1xf32, #tpu.memory_space<vmem>>, vector<1x8x1xf32>
    %58 = vector.shape_cast %57 : vector<1x8x1xf32> to vector<8x1xf32>
    %c2_36 = arith.constant 2 : index
    %c0_37 = arith.constant 0 : index
    %c0_38 = arith.constant 0 : index
    %59 = vector.load %arg3[%c2_36, %c0_37, %c0_38] : memref<4x8x1xf32, #tpu.memory_space<vmem>>, vector<1x8x1xf32>
    %60 = vector.shape_cast %59 : vector<1x8x1xf32> to vector<8x1xf32>
    %61 = vector.broadcast %58 : vector<8x1xf32> to vector<8x128xf32>
    %62 = arith.mulf %61, %55 : vector<8x128xf32>
    %c2_39 = arith.constant 2 : index
    %c0_40 = arith.constant 0 : index
    %c0_41 = arith.constant 0 : index
    %63 = vector.load %arg4[%c2_39, %c0_40, %c0_41] : memref<4x64x8xf32, #tpu.memory_space<vmem>>, vector<1x64x8xf32>
    %64 = vector.shape_cast %63 : vector<1x64x8xf32> to vector<64x8xf32>
    %cst_42 = arith.constant dense<0.000000e+00> : vector<64x128xf32>
    %65 = tpu.matmul %64, %62, %cst_42 {dimension_numbers = #tpu.dot_dimension_numbers<[1], [0], [0], [1], [0, 0, 1, 1], [], []>} : vector<64x8xf32>, vector<8x128xf32>, vector<64x128xf32> -> vector<64x128xf32>
    %c2_43 = arith.constant 2 : index
    %c0_44 = arith.constant 0 : index
    %c0_45 = arith.constant 0 : index
    %66 = vector.load %arg5[%c2_43, %c0_44, %c0_45] : memref<4x64x1xf32, #tpu.memory_space<vmem>>, vector<1x64x1xf32>
    %67 = vector.shape_cast %66 : vector<1x64x1xf32> to vector<64x1xf32>
    %68 = vector.broadcast %67 : vector<64x1xf32> to vector<64x128xf32>
    %69 = arith.addf %65, %68 : vector<64x128xf32>
    %cst_46 = arith.constant 0.000000e+00 : f32
    %70 = vector.broadcast %cst_46 : f32 to vector<64x128xf32>
    %71 = arith.maximumf %69, %70 : vector<64x128xf32>
    %cst_47 = arith.constant 0.000000e+00 : f32
    %72 = vector.broadcast %cst_47 : f32 to vector<64x128xf32>
    %73 = arith.minimumf %69, %72 : vector<64x128xf32>
    %cst_48 = arith.constant 0.00999999977 : f32
    %74 = vector.broadcast %cst_48 : f32 to vector<64x128xf32>
    %75 = arith.mulf %74, %73 : vector<64x128xf32>
    %76 = arith.addf %71, %75 : vector<64x128xf32>
    %c2_49 = arith.constant 2 : index
    %c0_50 = arith.constant 0 : index
    %c0_51 = arith.constant 0 : index
    %77 = vector.load %arg6[%c2_49, %c0_50, %c0_51] : memref<4x64x64xf32, #tpu.memory_space<vmem>>, vector<1x64x64xf32>
    %78 = vector.shape_cast %77 : vector<1x64x64xf32> to vector<64x64xf32>
    %cst_52 = arith.constant dense<0.000000e+00> : vector<64x128xf32>
    %79 = tpu.matmul %78, %76, %cst_52 {dimension_numbers = #tpu.dot_dimension_numbers<[1], [0], [0], [1], [0, 0, 1, 1], [], []>} : vector<64x64xf32>, vector<64x128xf32>, vector<64x128xf32> -> vector<64x128xf32>
    %c2_53 = arith.constant 2 : index
    %c0_54 = arith.constant 0 : index
    %c0_55 = arith.constant 0 : index
    %80 = vector.load %arg7[%c2_53, %c0_54, %c0_55] : memref<4x64x1xf32, #tpu.memory_space<vmem>>, vector<1x64x1xf32>
    %81 = vector.shape_cast %80 : vector<1x64x1xf32> to vector<64x1xf32>
    %82 = vector.broadcast %81 : vector<64x1xf32> to vector<64x128xf32>
    %83 = arith.addf %79, %82 : vector<64x128xf32>
    %cst_56 = arith.constant 0.000000e+00 : f32
    %84 = vector.broadcast %cst_56 : f32 to vector<64x128xf32>
    %85 = arith.maximumf %83, %84 : vector<64x128xf32>
    %cst_57 = arith.constant 0.000000e+00 : f32
    %86 = vector.broadcast %cst_57 : f32 to vector<64x128xf32>
    %87 = arith.minimumf %83, %86 : vector<64x128xf32>
    %cst_58 = arith.constant 0.00999999977 : f32
    %88 = vector.broadcast %cst_58 : f32 to vector<64x128xf32>
    %89 = arith.mulf %88, %87 : vector<64x128xf32>
    %90 = arith.addf %85, %89 : vector<64x128xf32>
    %c2_59 = arith.constant 2 : index
    %c0_60 = arith.constant 0 : index
    %c0_61 = arith.constant 0 : index
    %91 = vector.load %arg8[%c2_59, %c0_60, %c0_61] : memref<4x16x64xf32, #tpu.memory_space<vmem>>, vector<1x16x64xf32>
    %92 = vector.shape_cast %91 : vector<1x16x64xf32> to vector<16x64xf32>
    %cst_62 = arith.constant dense<0.000000e+00> : vector<16x128xf32>
    %93 = tpu.matmul %92, %90, %cst_62 {dimension_numbers = #tpu.dot_dimension_numbers<[1], [0], [0], [1], [0, 0, 1, 1], [], []>} : vector<16x64xf32>, vector<64x128xf32>, vector<16x128xf32> -> vector<16x128xf32>
    %c2_63 = arith.constant 2 : index
    %c0_64 = arith.constant 0 : index
    %c0_65 = arith.constant 0 : index
    %94 = vector.load %arg9[%c2_63, %c0_64, %c0_65] : memref<4x16x1xf32, #tpu.memory_space<vmem>>, vector<1x16x1xf32>
    %95 = vector.shape_cast %94 : vector<1x16x1xf32> to vector<16x1xf32>
    %96 = vector.broadcast %95 : vector<16x1xf32> to vector<16x128xf32>
    %97 = arith.addf %93, %96 : vector<16x128xf32>
    %98 = vector.extract_strided_slice %97 {offsets = [0, 0], sizes = [8, 128], strides = [1, 1]} : vector<16x128xf32> to vector<8x128xf32>
    %99 = math.tanh %98 : vector<8x128xf32>
    %100 = vector.broadcast %60 : vector<8x1xf32> to vector<8x128xf32>
    %101 = arith.mulf %99, %100 : vector<8x128xf32>
    %102 = vector.extract_strided_slice %97 {offsets = [8, 0], sizes = [8, 128], strides = [1, 1]} : vector<16x128xf32> to vector<8x128xf32>
    %103 = arith.subf %55, %102 : vector<8x128xf32>
    %104 = vector.broadcast %60 : vector<8x1xf32> to vector<8x128xf32>
    %105 = arith.mulf %104, %103 : vector<8x128xf32>
    %cst_66 = arith.constant 0.000000e+00 : f32
    %106 = vector.broadcast %cst_66 : f32 to vector<8x128xf32>
    %107 = arith.subf %106, %101 : vector<8x128xf32>
    %108 = math.exp %107 : vector<8x128xf32>
    %109 = arith.mulf %105, %108 : vector<8x128xf32>
    %110 = arith.addf %109, %62 : vector<8x128xf32>
    %111 = arith.addf %56, %101 : vector<8x128xf32>
    %c1 = arith.constant 1 : index
    %c0_67 = arith.constant 0 : index
    %c0_68 = arith.constant 0 : index
    %112 = vector.load %arg2[%c1, %c0_67, %c0_68] : memref<4x8x1xf32, #tpu.memory_space<vmem>>, vector<1x8x1xf32>
    %113 = vector.shape_cast %112 : vector<1x8x1xf32> to vector<8x1xf32>
    %c1_69 = arith.constant 1 : index
    %c0_70 = arith.constant 0 : index
    %c0_71 = arith.constant 0 : index
    %114 = vector.load %arg3[%c1_69, %c0_70, %c0_71] : memref<4x8x1xf32, #tpu.memory_space<vmem>>, vector<1x8x1xf32>
    %115 = vector.shape_cast %114 : vector<1x8x1xf32> to vector<8x1xf32>
    %116 = vector.broadcast %113 : vector<8x1xf32> to vector<8x128xf32>
    %117 = arith.mulf %116, %110 : vector<8x128xf32>
    %c1_72 = arith.constant 1 : index
    %c0_73 = arith.constant 0 : index
    %c0_74 = arith.constant 0 : index
    %118 = vector.load %arg4[%c1_72, %c0_73, %c0_74] : memref<4x64x8xf32, #tpu.memory_space<vmem>>, vector<1x64x8xf32>
    %119 = vector.shape_cast %118 : vector<1x64x8xf32> to vector<64x8xf32>
    %cst_75 = arith.constant dense<0.000000e+00> : vector<64x128xf32>
    %120 = tpu.matmul %119, %117, %cst_75 {dimension_numbers = #tpu.dot_dimension_numbers<[1], [0], [0], [1], [0, 0, 1, 1], [], []>} : vector<64x8xf32>, vector<8x128xf32>, vector<64x128xf32> -> vector<64x128xf32>
    %c1_76 = arith.constant 1 : index
    %c0_77 = arith.constant 0 : index
    %c0_78 = arith.constant 0 : index
    %121 = vector.load %arg5[%c1_76, %c0_77, %c0_78] : memref<4x64x1xf32, #tpu.memory_space<vmem>>, vector<1x64x1xf32>
    %122 = vector.shape_cast %121 : vector<1x64x1xf32> to vector<64x1xf32>
    %123 = vector.broadcast %122 : vector<64x1xf32> to vector<64x128xf32>
    %124 = arith.addf %120, %123 : vector<64x128xf32>
    %cst_79 = arith.constant 0.000000e+00 : f32
    %125 = vector.broadcast %cst_79 : f32 to vector<64x128xf32>
    %126 = arith.maximumf %124, %125 : vector<64x128xf32>
    %cst_80 = arith.constant 0.000000e+00 : f32
    %127 = vector.broadcast %cst_80 : f32 to vector<64x128xf32>
    %128 = arith.minimumf %124, %127 : vector<64x128xf32>
    %cst_81 = arith.constant 0.00999999977 : f32
    %129 = vector.broadcast %cst_81 : f32 to vector<64x128xf32>
    %130 = arith.mulf %129, %128 : vector<64x128xf32>
    %131 = arith.addf %126, %130 : vector<64x128xf32>
    %c1_82 = arith.constant 1 : index
    %c0_83 = arith.constant 0 : index
    %c0_84 = arith.constant 0 : index
    %132 = vector.load %arg6[%c1_82, %c0_83, %c0_84] : memref<4x64x64xf32, #tpu.memory_space<vmem>>, vector<1x64x64xf32>
    %133 = vector.shape_cast %132 : vector<1x64x64xf32> to vector<64x64xf32>
    %cst_85 = arith.constant dense<0.000000e+00> : vector<64x128xf32>
    %134 = tpu.matmul %133, %131, %cst_85 {dimension_numbers = #tpu.dot_dimension_numbers<[1], [0], [0], [1], [0, 0, 1, 1], [], []>} : vector<64x64xf32>, vector<64x128xf32>, vector<64x128xf32> -> vector<64x128xf32>
    %c1_86 = arith.constant 1 : index
    %c0_87 = arith.constant 0 : index
    %c0_88 = arith.constant 0 : index
    %135 = vector.load %arg7[%c1_86, %c0_87, %c0_88] : memref<4x64x1xf32, #tpu.memory_space<vmem>>, vector<1x64x1xf32>
    %136 = vector.shape_cast %135 : vector<1x64x1xf32> to vector<64x1xf32>
    %137 = vector.broadcast %136 : vector<64x1xf32> to vector<64x128xf32>
    %138 = arith.addf %134, %137 : vector<64x128xf32>
    %cst_89 = arith.constant 0.000000e+00 : f32
    %139 = vector.broadcast %cst_89 : f32 to vector<64x128xf32>
    %140 = arith.maximumf %138, %139 : vector<64x128xf32>
    %cst_90 = arith.constant 0.000000e+00 : f32
    %141 = vector.broadcast %cst_90 : f32 to vector<64x128xf32>
    %142 = arith.minimumf %138, %141 : vector<64x128xf32>
    %cst_91 = arith.constant 0.00999999977 : f32
    %143 = vector.broadcast %cst_91 : f32 to vector<64x128xf32>
    %144 = arith.mulf %143, %142 : vector<64x128xf32>
    %145 = arith.addf %140, %144 : vector<64x128xf32>
    %c1_92 = arith.constant 1 : index
    %c0_93 = arith.constant 0 : index
    %c0_94 = arith.constant 0 : index
    %146 = vector.load %arg8[%c1_92, %c0_93, %c0_94] : memref<4x16x64xf32, #tpu.memory_space<vmem>>, vector<1x16x64xf32>
    %147 = vector.shape_cast %146 : vector<1x16x64xf32> to vector<16x64xf32>
    %cst_95 = arith.constant dense<0.000000e+00> : vector<16x128xf32>
    %148 = tpu.matmul %147, %145, %cst_95 {dimension_numbers = #tpu.dot_dimension_numbers<[1], [0], [0], [1], [0, 0, 1, 1], [], []>} : vector<16x64xf32>, vector<64x128xf32>, vector<16x128xf32> -> vector<16x128xf32>
    %c1_96 = arith.constant 1 : index
    %c0_97 = arith.constant 0 : index
    %c0_98 = arith.constant 0 : index
    %149 = vector.load %arg9[%c1_96, %c0_97, %c0_98] : memref<4x16x1xf32, #tpu.memory_space<vmem>>, vector<1x16x1xf32>
    %150 = vector.shape_cast %149 : vector<1x16x1xf32> to vector<16x1xf32>
    %151 = vector.broadcast %150 : vector<16x1xf32> to vector<16x128xf32>
    %152 = arith.addf %148, %151 : vector<16x128xf32>
    %153 = vector.extract_strided_slice %152 {offsets = [0, 0], sizes = [8, 128], strides = [1, 1]} : vector<16x128xf32> to vector<8x128xf32>
    %154 = math.tanh %153 : vector<8x128xf32>
    %155 = vector.broadcast %115 : vector<8x1xf32> to vector<8x128xf32>
    %156 = arith.mulf %154, %155 : vector<8x128xf32>
    %157 = vector.extract_strided_slice %152 {offsets = [8, 0], sizes = [8, 128], strides = [1, 1]} : vector<16x128xf32> to vector<8x128xf32>
    %158 = arith.subf %110, %157 : vector<8x128xf32>
    %159 = vector.broadcast %115 : vector<8x1xf32> to vector<8x128xf32>
    %160 = arith.mulf %159, %158 : vector<8x128xf32>
    %cst_99 = arith.constant 0.000000e+00 : f32
    %161 = vector.broadcast %cst_99 : f32 to vector<8x128xf32>
    %162 = arith.subf %161, %156 : vector<8x128xf32>
    %163 = math.exp %162 : vector<8x128xf32>
    %164 = arith.mulf %160, %163 : vector<8x128xf32>
    %165 = arith.addf %164, %117 : vector<8x128xf32>
    %166 = arith.addf %111, %156 : vector<8x128xf32>
    %c0_100 = arith.constant 0 : index
    %c0_101 = arith.constant 0 : index
    %c0_102 = arith.constant 0 : index
    %167 = vector.load %arg2[%c0_100, %c0_101, %c0_102] : memref<4x8x1xf32, #tpu.memory_space<vmem>>, vector<1x8x1xf32>
    %168 = vector.shape_cast %167 : vector<1x8x1xf32> to vector<8x1xf32>
    %c0_103 = arith.constant 0 : index
    %c0_104 = arith.constant 0 : index
    %c0_105 = arith.constant 0 : index
    %169 = vector.load %arg3[%c0_103, %c0_104, %c0_105] : memref<4x8x1xf32, #tpu.memory_space<vmem>>, vector<1x8x1xf32>
    %170 = vector.shape_cast %169 : vector<1x8x1xf32> to vector<8x1xf32>
    %171 = vector.broadcast %168 : vector<8x1xf32> to vector<8x128xf32>
    %172 = arith.mulf %171, %165 : vector<8x128xf32>
    %c0_106 = arith.constant 0 : index
    %c0_107 = arith.constant 0 : index
    %c0_108 = arith.constant 0 : index
    %173 = vector.load %arg4[%c0_106, %c0_107, %c0_108] : memref<4x64x8xf32, #tpu.memory_space<vmem>>, vector<1x64x8xf32>
    %174 = vector.shape_cast %173 : vector<1x64x8xf32> to vector<64x8xf32>
    %cst_109 = arith.constant dense<0.000000e+00> : vector<64x128xf32>
    %175 = tpu.matmul %174, %172, %cst_109 {dimension_numbers = #tpu.dot_dimension_numbers<[1], [0], [0], [1], [0, 0, 1, 1], [], []>} : vector<64x8xf32>, vector<8x128xf32>, vector<64x128xf32> -> vector<64x128xf32>
    %c0_110 = arith.constant 0 : index
    %c0_111 = arith.constant 0 : index
    %c0_112 = arith.constant 0 : index
    %176 = vector.load %arg5[%c0_110, %c0_111, %c0_112] : memref<4x64x1xf32, #tpu.memory_space<vmem>>, vector<1x64x1xf32>
    %177 = vector.shape_cast %176 : vector<1x64x1xf32> to vector<64x1xf32>
    %178 = vector.broadcast %177 : vector<64x1xf32> to vector<64x128xf32>
    %179 = arith.addf %175, %178 : vector<64x128xf32>
    %cst_113 = arith.constant 0.000000e+00 : f32
    %180 = vector.broadcast %cst_113 : f32 to vector<64x128xf32>
    %181 = arith.maximumf %179, %180 : vector<64x128xf32>
    %cst_114 = arith.constant 0.000000e+00 : f32
    %182 = vector.broadcast %cst_114 : f32 to vector<64x128xf32>
    %183 = arith.minimumf %179, %182 : vector<64x128xf32>
    %cst_115 = arith.constant 0.00999999977 : f32
    %184 = vector.broadcast %cst_115 : f32 to vector<64x128xf32>
    %185 = arith.mulf %184, %183 : vector<64x128xf32>
    %186 = arith.addf %181, %185 : vector<64x128xf32>
    %c0_116 = arith.constant 0 : index
    %c0_117 = arith.constant 0 : index
    %c0_118 = arith.constant 0 : index
    %187 = vector.load %arg6[%c0_116, %c0_117, %c0_118] : memref<4x64x64xf32, #tpu.memory_space<vmem>>, vector<1x64x64xf32>
    %188 = vector.shape_cast %187 : vector<1x64x64xf32> to vector<64x64xf32>
    %cst_119 = arith.constant dense<0.000000e+00> : vector<64x128xf32>
    %189 = tpu.matmul %188, %186, %cst_119 {dimension_numbers = #tpu.dot_dimension_numbers<[1], [0], [0], [1], [0, 0, 1, 1], [], []>} : vector<64x64xf32>, vector<64x128xf32>, vector<64x128xf32> -> vector<64x128xf32>
    %c0_120 = arith.constant 0 : index
    %c0_121 = arith.constant 0 : index
    %c0_122 = arith.constant 0 : index
    %190 = vector.load %arg7[%c0_120, %c0_121, %c0_122] : memref<4x64x1xf32, #tpu.memory_space<vmem>>, vector<1x64x1xf32>
    %191 = vector.shape_cast %190 : vector<1x64x1xf32> to vector<64x1xf32>
    %192 = vector.broadcast %191 : vector<64x1xf32> to vector<64x128xf32>
    %193 = arith.addf %189, %192 : vector<64x128xf32>
    %cst_123 = arith.constant 0.000000e+00 : f32
    %194 = vector.broadcast %cst_123 : f32 to vector<64x128xf32>
    %195 = arith.maximumf %193, %194 : vector<64x128xf32>
    %cst_124 = arith.constant 0.000000e+00 : f32
    %196 = vector.broadcast %cst_124 : f32 to vector<64x128xf32>
    %197 = arith.minimumf %193, %196 : vector<64x128xf32>
    %cst_125 = arith.constant 0.00999999977 : f32
    %198 = vector.broadcast %cst_125 : f32 to vector<64x128xf32>
    %199 = arith.mulf %198, %197 : vector<64x128xf32>
    %200 = arith.addf %195, %199 : vector<64x128xf32>
    %c0_126 = arith.constant 0 : index
    %c0_127 = arith.constant 0 : index
    %c0_128 = arith.constant 0 : index
    %201 = vector.load %arg8[%c0_126, %c0_127, %c0_128] : memref<4x16x64xf32, #tpu.memory_space<vmem>>, vector<1x16x64xf32>
    %202 = vector.shape_cast %201 : vector<1x16x64xf32> to vector<16x64xf32>
    %cst_129 = arith.constant dense<0.000000e+00> : vector<16x128xf32>
    %203 = tpu.matmul %202, %200, %cst_129 {dimension_numbers = #tpu.dot_dimension_numbers<[1], [0], [0], [1], [0, 0, 1, 1], [], []>} : vector<16x64xf32>, vector<64x128xf32>, vector<16x128xf32> -> vector<16x128xf32>
    %c0_130 = arith.constant 0 : index
    %c0_131 = arith.constant 0 : index
    %c0_132 = arith.constant 0 : index
    %204 = vector.load %arg9[%c0_130, %c0_131, %c0_132] : memref<4x16x1xf32, #tpu.memory_space<vmem>>, vector<1x16x1xf32>
    %205 = vector.shape_cast %204 : vector<1x16x1xf32> to vector<16x1xf32>
    %206 = vector.broadcast %205 : vector<16x1xf32> to vector<16x128xf32>
    %207 = arith.addf %203, %206 : vector<16x128xf32>
    %208 = vector.extract_strided_slice %207 {offsets = [0, 0], sizes = [8, 128], strides = [1, 1]} : vector<16x128xf32> to vector<8x128xf32>
    %209 = math.tanh %208 : vector<8x128xf32>
    %210 = vector.broadcast %170 : vector<8x1xf32> to vector<8x128xf32>
    %211 = arith.mulf %209, %210 : vector<8x128xf32>
    %212 = vector.extract_strided_slice %207 {offsets = [8, 0], sizes = [8, 128], strides = [1, 1]} : vector<16x128xf32> to vector<8x128xf32>
    %213 = arith.subf %165, %212 : vector<8x128xf32>
    %214 = vector.broadcast %170 : vector<8x1xf32> to vector<8x128xf32>
    %215 = arith.mulf %214, %213 : vector<8x128xf32>
    %cst_133 = arith.constant 0.000000e+00 : f32
    %216 = vector.broadcast %cst_133 : f32 to vector<8x128xf32>
    %217 = arith.subf %216, %211 : vector<8x128xf32>
    %218 = math.exp %217 : vector<8x128xf32>
    %219 = arith.mulf %215, %218 : vector<8x128xf32>
    %220 = arith.addf %219, %172 : vector<8x128xf32>
    %221 = arith.addf %166, %211 : vector<8x128xf32>
    %cst_134 = arith.constant -5.000000e-01 : f32
    %222 = vector.broadcast %cst_134 : f32 to vector<8x128xf32>
    %223 = arith.mulf %222, %220 : vector<8x128xf32>
    %224 = arith.mulf %223, %220 : vector<8x128xf32>
    %225 = arith.subf %224, %221 : vector<8x128xf32>
    %cst_135 = arith.constant dense<0.000000e+00> : vector<128xf32>
    %226 = vector.multi_reduction <add>, %225, %cst_135 [0] : vector<8x128xf32> to vector<128xf32>
    %227 = vector.shape_cast %226 : vector<128xf32> to vector<1x128xf32>
    %cst_136 = arith.constant 7.35150814 : f32
    %228 = vector.broadcast %cst_136 : f32 to vector<1x128xf32>
    %229 = arith.subf %227, %228 : vector<1x128xf32>
    %c0_137 = arith.constant 0 : index
    %c0_138 = arith.constant 0 : index
    %230 = vector.load %arg10[%c0_137, %c0_138] : memref<1x128xf32, #tpu.memory_space<vmem>>, vector<1x128xf32>
    tpu.vector_store %arg10[%c0_137, %c0_138], %229 {strides = array<i32>} : memref<1x128xf32, #tpu.memory_space<vmem>>, vector<1x128xf32>,
    return
  }
  func.func @transform_0(%arg0: i32) -> (i32, i32) {
    %c0_i32 = arith.constant 0 : i32
    %c0_i32_0 = arith.constant 0 : i32
    return %c0_i32, %arg0 : i32, i32
  }
  func.func @transform_1(%arg0: i32) -> (i32, i32, i32) {
    %c0_i32 = arith.constant 0 : i32
    %c0_i32_0 = arith.constant 0 : i32
    %c0_i32_1 = arith.constant 0 : i32
    %c0_i32_2 = arith.constant 0 : i32
    return %c0_i32, %c0_i32_0, %c0_i32_1 : i32, i32, i32
  }
  func.func @transform_2(%arg0: i32) -> (i32, i32, i32) {
    %c0_i32 = arith.constant 0 : i32
    %c0_i32_0 = arith.constant 0 : i32
    %c0_i32_1 = arith.constant 0 : i32
    %c0_i32_2 = arith.constant 0 : i32
    return %c0_i32, %c0_i32_0, %c0_i32_1 : i32, i32, i32
  }
  func.func @transform_3(%arg0: i32) -> (i32, i32, i32) {
    %c0_i32 = arith.constant 0 : i32
    %c0_i32_0 = arith.constant 0 : i32
    %c0_i32_1 = arith.constant 0 : i32
    %c0_i32_2 = arith.constant 0 : i32
    return %c0_i32, %c0_i32_0, %c0_i32_1 : i32, i32, i32
  }
  func.func @transform_4(%arg0: i32) -> (i32, i32, i32) {
    %c0_i32 = arith.constant 0 : i32
    %c0_i32_0 = arith.constant 0 : i32
    %c0_i32_1 = arith.constant 0 : i32
    %c0_i32_2 = arith.constant 0 : i32
    return %c0_i32, %c0_i32_0, %c0_i32_1 : i32, i32, i32
  }
  func.func @transform_5(%arg0: i32) -> (i32, i32, i32) {
    %c0_i32 = arith.constant 0 : i32
    %c0_i32_0 = arith.constant 0 : i32
    %c0_i32_1 = arith.constant 0 : i32
    %c0_i32_2 = arith.constant 0 : i32
    return %c0_i32, %c0_i32_0, %c0_i32_1 : i32, i32, i32
  }
  func.func @transform_6(%arg0: i32) -> (i32, i32, i32) {
    %c0_i32 = arith.constant 0 : i32
    %c0_i32_0 = arith.constant 0 : i32
    %c0_i32_1 = arith.constant 0 : i32
    %c0_i32_2 = arith.constant 0 : i32
    return %c0_i32, %c0_i32_0, %c0_i32_1 : i32, i32, i32
  }
  func.func @transform_7(%arg0: i32) -> (i32, i32, i32) {
    %c0_i32 = arith.constant 0 : i32
    %c0_i32_0 = arith.constant 0 : i32
    %c0_i32_1 = arith.constant 0 : i32
    %c0_i32_2 = arith.constant 0 : i32
    return %c0_i32, %c0_i32_0, %c0_i32_1 : i32, i32, i32
  }
  func.func @transform_8(%arg0: i32) -> (i32, i32, i32) {
    %c0_i32 = arith.constant 0 : i32
    %c0_i32_0 = arith.constant 0 : i32
    %c0_i32_1 = arith.constant 0 : i32
    %c0_i32_2 = arith.constant 0 : i32
    return %c0_i32, %c0_i32_0, %c0_i32_1 : i32, i32, i32
  }
  func.func @transform_9(%arg0: i32) -> (i32, i32) {
    %c0_i32 = arith.constant 0 : i32
    %c0_i32_0 = arith.constant 0 : i32
    return %c0_i32, %arg0 : i32, i32
  }
}

</mosaic_0001>

<llo_original>
// kernel: realnvp_log_prob.1
$region0: #{realnvp_log_prob.1}
  #allocation0 [shape = 'u32[]', space=smem, size = 0x4, offset = 0x4, fixed_abs, tag = 'smem constant byte address 0x4 - core index']
  #allocation1 [shape = 'u32[72,128]{1,0:T(1,128)}', space=vmem, size = 0x9000, scoped, tag = 'internal scratch']
  %s0 = inlined_call_operand.vmem [shape: f32[8,256], index: 0, kind: input, shape index: {}]
  %s1 = inlined_call_operand.vmem [shape: f32[4,8,1], index: 1, kind: input, shape index: {}]
  %s2 = inlined_call_operand.vmem [shape: f32[4,8,1], index: 2, kind: input, shape index: {}]
  %s3 = inlined_call_operand.vmem [shape: f32[4,64,8], index: 3, kind: input, shape index: {}]
  %s4 = inlined_call_operand.vmem [shape: f32[4,64,1], index: 4, kind: input, shape index: {}]
  %s5 = inlined_call_operand.vmem [shape: f32[4,64,64], index: 5, kind: input, shape index: {}]
  %s6 = inlined_call_operand.vmem [shape: f32[4,64,1], index: 6, kind: input, shape index: {}]
  %s7 = inlined_call_operand.vmem [shape: f32[4,16,64], index: 7, kind: input, shape index: {}]
  %s8 = inlined_call_operand.vmem [shape: f32[4,16,1], index: 8, kind: input, shape index: {}]
  %s9 = inlined_call_operand.hbm [shape: f32[1,256], index: 9, kind: output, shape index: {}]
  %s10 = sld [smem:[#allocation0]]
  $region69: #{realnvp_log_prob.1} parent=0
    _
  %s12 = ssub.s32 1, %s10
  %s13 = scalar_select 0, %s12, %s10
  $region1: #{realnvp_log_prob.1} parent=0
    #allocation2 [shape = 'u8[1024]{0}', space=vmem, size = 0x400, scoped, tag = 'output window, operand 0']
    #allocation3 [shape = 's32[2]{0}', space=sflag, size = 0x8, scoped, tag = 'scoped memory for realnvp_log_prob.1']
    %14 = vsyncpa [#allocation3], 0
    %s15 = scalar_lea.sflag [#allocation3], 1
    %16 = vsyncpa %s15, 0
    loop: start=0, step=1, limit=4
    $region2: #{realnvp_log_prob.1} parent=1 // loop_pre_header
      _
    $region3: #{realnvp_log_prob.1} parent=1 // loop_header
      %s18 = sphi 0, %s22
      %p19 = scmp.ge.s32.totalorder %s18, 4
      %s28 = sphi 0, %s30
      %s31 = sphi 0, %s28
      %s32 = sphi 0, %s31
      %s48 = sphi 0, %s32
      %s52 = sphi 0, %s52
      %s54 = sphi 0, %s52
      %s55 = sphi 0, %s54
      %s69 = sphi 0, %s55
      %s73 = sphi 0, %s73
      %s75 = sphi 0, %s73
      %s76 = sphi 0, %s75
      %s90 = sphi 0, %s76
      %s94 = sphi 0, %s94
      %s96 = sphi 0, %s94
      %s97 = sphi 0, %s96
      %s111 = sphi 0, %s97
      %s115 = sphi 0, %s115
      %s117 = sphi 0, %s115
      %s118 = sphi 0, %s117
      %s132 = sphi 0, %s118
      %s136 = sphi 0, %s136
      %s138 = sphi 0, %s136
      %s139 = sphi 0, %s138
      %s153 = sphi 0, %s139
      %s157 = sphi 0, %s157
      %s159 = sphi 0, %s157
      %s160 = sphi 0, %s159
      %s174 = sphi 0, %s160
      %s178 = sphi 0, %s178
      %s180 = sphi 0, %s178
      %s181 = sphi 0, %s180
      %s195 = sphi 0, %s181
      %s199 = sphi 0, %s199
      %s201 = sphi 0, %s199
      %s202 = sphi 0, %s201
      %s216 = sphi 0, %s202
      %s222 = sphi 0, %s224
      %s225 = sphi 0, %s222
      %s226 = sphi 0, %s225
      %s242 = sphi 0, %s226
    $region4: #{realnvp_log_prob.1} parent=1 // loop_header_branch
      %21 = sbr.rel (%p19) target = $region8
    $region5: #{realnvp_log_prob.1} parent=1 // loop_body
      %s23 = ssub.s32 %s18, 1
      %s24 = ssub.s32 %s18, 2
      %s25 = sadd.s32 %s18, 1
      %s26 = ssub.s32 %s18, %s25
      %p27 = scmp.eq.s32.totalorder %s26, 0
      %s29 = sadd.s32 %s28, 1
      %s30 = scalar_select %p27, %s28, %s29
      %p33 = pneg %p27
      %p34 = scmp.eq.s32.totalorder %s18, 1
      %p35 = por %p33, %p34
      %p36 = scmp.ne.s32.totalorder %s28, %s31
      %p37 = scmp.eq.s32.totalorder %s18, 0
      %p38 = por %p36, %p37
      %p39 = scmp.ne.s32.totalorder %s28, %s31
      %p40 = scmp.eq.s32.totalorder %s23, 1
      %p41 = por %p39, %p40
      %p42 = scmp.ne.s32.totalorder %s31, %s32
      %p43 = scmp.eq.s32.totalorder %s23, 0
      %p44 = por %p42, %p43
      %p45 = scmp.ne.s32.totalorder %s31, %s32
      %p46 = scmp.eq.s32.totalorder %s24, 1
      %p47 = por %p45, %p46
      %p49 = scmp.ne.s32.totalorder %s32, %s48
      %p50 = scmp.eq.s32.totalorder %s24, 0
      %p51 = por %p49, %p50
      %s53 = sadd.s32 %s52, 1
      %p56 = scmp.eq.s32.totalorder %s18, 1
      %p57 = scmp.ne.s32.totalorder %s52, %s54
      %p58 = scmp.eq.s32.totalorder %s18, 0
      %p59 = por %p57, %p58
      %p60 = scmp.ne.s32.totalorder %s52, %s54
      %p61 = scmp.eq.s32.totalorder %s23, 1
      %p62 = por %p60, %p61
      %p63 = scmp.ne.s32.totalorder %s54, %s55
      %p64 = scmp.eq.s32.totalorder %s23, 0
      %p65 = por %p63, %p64
      %p66 = scmp.ne.s32.totalorder %s54, %s55
      %p67 = scmp.eq.s32.totalorder %s24, 1
      %p68 = por %p66, %p67
      %p70 = scmp.ne.s32.totalorder %s55, %s69
      %p71 = scmp.eq.s32.totalorder %s24, 0
      %p72 = por %p70, %p71
      %s74 = sadd.s32 %s73, 1
      %p77 = scmp.eq.s32.totalorder %s18, 1
      %p78 = scmp.ne.s32.totalorder %s73, %s75
      %p79 = scmp.eq.s32.totalorder %s18, 0
      %p80 = por %p78, %p79
      %p81 = scmp.ne.s32.totalorder %s73, %s75
      %p82 = scmp.eq.s32.totalorder %s23, 1
      %p83 = por %p81, %p82
      %p84 = scmp.ne.s32.totalorder %s75, %s76
      %p85 = scmp.eq.s32.totalorder %s23, 0
      %p86 = por %p84, %p85
      %p87 = scmp.ne.s32.totalorder %s75, %s76
      %p88 = scmp.eq.s32.totalorder %s24, 1
      %p89 = por %p87, %p88
      %p91 = scmp.ne.s32.totalorder %s76, %s90
      %p92 = scmp.eq.s32.totalorder %s24, 0
      %p93 = por %p91, %p92
      %s95 = sadd.s32 %s94, 1
      %p98 = scmp.eq.s32.totalorder %s18, 1
      %p99 = scmp.ne.s32.totalorder %s94, %s96
      %p100 = scmp.eq.s32.totalorder %s18, 0
      %p101 = por %p99, %p100
      %p102 = scmp.ne.s32.totalorder %s94, %s96
      %p103 = scmp.eq.s32.totalorder %s23, 1
      %p104 = por %p102, %p103
      %p105 = scmp.ne.s32.totalorder %s96, %s97
      %p106 = scmp.eq.s32.totalorder %s23, 0
      %p107 = por %p105, %p106
      %p108 = scmp.ne.s32.totalorder %s96, %s97
      %p109 = scmp.eq.s32.totalorder %s24, 1
      %p110 = por %p108, %p109
      %p112 = scmp.ne.s32.totalorder %s97, %s111
      %p113 = scmp.eq.s32.totalorder %s24, 0
      %p114 = por %p112, %p113
      %s116 = sadd.s32 %s115, 1
      %p119 = scmp.eq.s32.totalorder %s18, 1
      %p120 = scmp.ne.s32.totalorder %s115, %s117
      %p121 = scmp.eq.s32.totalorder %s18, 0
      %p122 = por %p120, %p121
      %p123 = scmp.ne.s32.totalorder %s115, %s117
      %p124 = scmp.eq.s32.totalorder %s23, 1
      %p125 = por %p123, %p124
      %p126 = scmp.ne.s32.totalorder %s117, %s118
      %p127 = scmp.eq.s32.totalorder %s23, 0
      %p128 = por %p126, %p127
      %p129 = scmp.ne.s32.totalorder %s117, %s118
      %p130 = scmp.eq.s32.totalorder %s24, 1
      %p131 = por %p129, %p130
      %p133 = scmp.ne.s32.totalorder %s118, %s132
      %p134 = scmp.eq.s32.totalorder %s24, 0
      %p135 = por %p133, %p134
      %s137 = sadd.s32 %s136, 1
      %p140 = scmp.eq.s32.totalorder %s18, 1
      %p141 = scmp.ne.s32.totalorder %s136, %s138
      %p142 = scmp.eq.s32.totalorder %s18, 0
      %p143 = por %p141, %p142
      %p144 = scmp.ne.s32.totalorder %s136, %s138
      %p145 = scmp.eq.s32.totalorder %s23, 1
      %p146 = por %p144, %p145
      %p147 = scmp.ne.s32.totalorder %s138, %s139
      %p148 = scmp.eq.s32.totalorder %s23, 0
      %p149 = por %p147, %p148
      %p150 = scmp.ne.s32.totalorder %s138, %s139
      %p151 = scmp.eq.s32.totalorder %s24, 1
      %p152 = por %p150, %p151
      %p154 = scmp.ne.s32.totalorder %s139, %s153
      %p155 = scmp.eq.s32.totalorder %s24, 0
      %p156 = por %p154, %p155
      %s158 = sadd.s32 %s157, 1
      %p161 = scmp.eq.s32.totalorder %s18, 1
      %p162 = scmp.ne.s32.totalorder %s157, %s159
      %p163 = scmp.eq.s32.totalorder %s18, 0
      %p164 = por %p162, %p163
      %p165 = scmp.ne.s32.totalorder %s157, %s159
      %p166 = scmp.eq.s32.totalorder %s23, 1
      %p167 = por %p165, %p166
      %p168 = scmp.ne.s32.totalorder %s159, %s160
      %p169 = scmp.eq.s32.totalorder %s23, 0
      %p170 = por %p168, %p169
      %p171 = scmp.ne.s32.totalorder %s159, %s160
      %p172 = scmp.eq.s32.totalorder %s24, 1
      %p173 = por %p171, %p172
      %p175 = scmp.ne.s32.totalorder %s160, %s174
      %p176 = scmp.eq.s32.totalorder %s24, 0
      %p177 = por %p175, %p176
      %s179 = sadd.s32 %s178, 1
      %p182 = scmp.eq.s32.totalorder %s18, 1
      %p183 = scmp.ne.s32.totalorder %s178, %s180
      %p184 = scmp.eq.s32.totalorder %s18, 0
      %p185 = por %p183, %p184
      %p186 = scmp.ne.s32.totalorder %s178, %s180
      %p187 = scmp.eq.s32.totalorder %s23, 1
      %p188 = por %p186, %p187
      %p189 = scmp.ne.s32.totalorder %s180, %s181
      %p190 = scmp.eq.s32.totalorder %s23, 0
      %p191 = por %p189, %p190
      %p192 = scmp.ne.s32.totalorder %s180, %s181
      %p193 = scmp.eq.s32.totalorder %s24, 1
      %p194 = por %p192, %p193
      %p196 = scmp.ne.s32.totalorder %s181, %s195
      %p197 = scmp.eq.s32.totalorder %s24, 0
      %p198 = por %p196, %p197
      %s200 = sadd.s32 %s199, 1
      %p203 = scmp.eq.s32.totalorder %s18, 1
      %p204 = scmp.ne.s32.totalorder %s199, %s201
      %p205 = scmp.eq.s32.totalorder %s18, 0
      %p206 = por %p204, %p205
      %p207 = scmp.ne.s32.totalorder %s199, %s201
      %p208 = scmp.eq.s32.totalorder %s23, 1
      %p209 = por %p207, %p208
      %p210 = scmp.ne.s32.totalorder %s201, %s202
      %p211 = scmp.eq.s32.totalorder %s23, 0
      %p212 = por %p210, %p211
      %p213 = scmp.ne.s32.totalorder %s201, %s202
      %p214 = scmp.eq.s32.totalorder %s24, 1
      %p215 = por %p213, %p214
      %p217 = scmp.ne.s32.totalorder %s202, %s216
      %p218 = scmp.eq.s32.totalorder %s24, 0
      %p219 = por %p217, %p218
      %s220 = ssub.s32 %s18, %s25
      %p221 = scmp.eq.s32.totalorder %s220, 0
      %s223 = sadd.s32 %s222, 1
      %s224 = scalar_select %p221, %s222, %s223
      %p227 = pneg %p221
      %p228 = scmp.eq.s32.totalorder %s18, 1
      %p229 = por %p227, %p228
      %p230 = scmp.ne.s32.totalorder %s222, %s225
      %p231 = scmp.eq.s32.totalorder %s18, 0
      %p232 = por %p230, %p231
      %p233 = scmp.ne.s32.totalorder %s222, %s225
      %p234 = scmp.eq.s32.totalorder %s23, 1
      %p235 = por %p233, %p234
      %p236 = scmp.ne.s32.totalorder %s225, %s226
      %p237 = scmp.eq.s32.totalorder %s23, 0
      %p238 = por %p236, %p237
      %p239 = scmp.ne.s32.totalorder %s225, %s226
      %p240 = scmp.eq.s32.totalorder %s24, 1
      %p241 = por %p239, %p240
      %p243 = scmp.ne.s32.totalorder %s226, %s242
      %p244 = scmp.eq.s32.totalorder %s24, 0
      %p245 = por %p243, %p244
      %p246 = scmp.le.s32.totalorder 1, %s18
      %p247 = scmp.lt.s32.totalorder %s18, 3
      %p248 = pnand %p246, %p247
      %p249 = pneg %p248
      // Predicated region
      $region9: #{realnvp_log_prob.1} parent=5 // pred_check
        _
      $region10: #{realnvp_log_prob.1} parent=5 // pred_check_branch
        %251 = sbr.rel (%p248) target = $region12
      $region11: #{realnvp_log_prob.1} parent=5 // pred_region
        %s252 = ssub.s32 %s18, 1
        // Predicated region
        $region13: #{realnvp_log_prob.1} parent=11 // pred_check
          %p253 = pneg %p65
        $region14: #{realnvp_log_prob.1} parent=11 // pred_check_branch
          %255 = sbr.rel (%p253) target = $region16
        $region15: #{realnvp_log_prob.1} parent=11 // pred_region
          _
        $region16: #{realnvp_log_prob.1} parent=11 // pred_fallthru
          _
        // Predicated region
        $region17: #{realnvp_log_prob.1} parent=11 // pred_check
          %p256 = pneg %p86
        $region18: #{realnvp_log_prob.1} parent=11 // pred_check_branch
          %258 = sbr.rel (%p256) target = $region20
        $region19: #{realnvp_log_prob.1} parent=11 // pred_region
          _
        $region20: #{realnvp_log_prob.1} parent=11 // pred_fallthru
          _
        // Predicated region
        $region21: #{realnvp_log_prob.1} parent=11 // pred_check
          %p259 = pneg %p107
        $region22: #{realnvp_log_prob.1} parent=11 // pred_check_branch
          %261 = sbr.rel (%p259) target = $region24
        $region23: #{realnvp_log_prob.1} parent=11 // pred_region
          _
        $region24: #{realnvp_log_prob.1} parent=11 // pred_fallthru
          _
        // Predicated region
        $region25: #{realnvp_log_prob.1} parent=11 // pred_check
          %p262 = pneg %p128
        $region26: #{realnvp_log_prob.1} parent=11 // pred_check_branch
          %264 = sbr.rel (%p262) target = $region28
        $region27: #{realnvp_log_prob.1} parent=11 // pred_region
          _
        $region28: #{realnvp_log_prob.1} parent=11 // pred_fallthru
          _
        // Predicated region
        $region29: #{realnvp_log_prob.1} parent=11 // pred_check
          %p265 = pneg %p149
        $region30: #{realnvp_log_prob.1} parent=11 // pred_check_branch
          %267 = sbr.rel (%p265) target = $region32
        $region31: #{realnvp_log_prob.1} parent=11 // pred_region
          _
        $region32: #{realnvp_log_prob.1} parent=11 // pred_fallthru
          _
        // Predicated region
        $region33: #{realnvp_log_prob.1} parent=11 // pred_check
          %p268 = pneg %p170
        $region34: #{realnvp_log_prob.1} parent=11 // pred_check_branch
          %270 = sbr.rel (%p268) target = $region36
        $region35: #{realnvp_log_prob.1} parent=11 // pred_region
          _
        $region36: #{realnvp_log_prob.1} parent=11 // pred_fallthru
          _
        // Predicated region
        $region37: #{realnvp_log_prob.1} parent=11 // pred_check
          %p271 = pneg %p191
        $region38: #{realnvp_log_prob.1} parent=11 // pred_check_branch
          %273 = sbr.rel (%p271) target = $region40
        $region39: #{realnvp_log_prob.1} parent=11 // pred_region
          _
        $region40: #{realnvp_log_prob.1} parent=11 // pred_fallthru
          _
        // Predicated region
        $region41: #{realnvp_log_prob.1} parent=11 // pred_check
          %p274 = pneg %p212
        $region42: #{realnvp_log_prob.1} parent=11 // pred_check_branch
          %276 = sbr.rel (%p274) target = $region44
        $region43: #{realnvp_log_prob.1} parent=11 // pred_region
          _
        $region44: #{realnvp_log_prob.1} parent=11 // pred_fallthru
          _
      $region12: #{realnvp_log_prob.1} parent=5 // pred_fallthru
        _
      %p277 = scmp.lt.s32.totalorder %s18, 2
      // Predicated region
      $region45: #{realnvp_log_prob.1} parent=5 // pred_check
        %p278 = pneg %p277
      $region46: #{realnvp_log_prob.1} parent=5 // pred_check_branch
        %280 = sbr.rel (%p278) target = $region48
      $region47: #{realnvp_log_prob.1} parent=5 // pred_region
        // Predicated region
        $region49: #{realnvp_log_prob.1} parent=47 // pred_check
          %p281 = pneg %p38
        $region50: #{realnvp_log_prob.1} parent=47 // pred_check_branch
          %283 = sbr.rel (%p281) target = $region52
        $region51: #{realnvp_log_prob.1} parent=47 // pred_region
          %p284 = scmp.lt.s32.totalorder %s18, 1
          %s285 = scalar_select %p284, %s18, 1
          %s286 = smul.addr %s285, 8
          %s287 = scalar_lea.vmem %s0, %s286
        $region52: #{realnvp_log_prob.1} parent=47 // pred_fallthru
          _
      $region48: #{realnvp_log_prob.1} parent=5 // pred_fallthru
        _
      %p288 = scmp.le.s32.totalorder 1, %s18
      %p289 = scmp.lt.s32.totalorder %s18, 3
      %p290 = pnand %p288, %p289
      %p291 = pneg %p290
      // Predicated region
      $region53: #{realnvp_log_prob.1} parent=5 // pred_check
        _
      $region54: #{realnvp_log_prob.1} parent=5 // pred_check_branch
        %293 = sbr.rel (%p290) target = $region56
      $region55: #{realnvp_log_prob.1} parent=5 // pred_region
        %s294 = ssub.s32 %s18, 1
        %p295 = scmp.lt.s32.totalorder %s23, 1
        %s296 = scalar_select %p295, %s23, 1
        %s297 = smul.addr %s296, 8
        %s298 = scalar_lea.vmem %s0, %s297
        %p299 = pneg %p44
        %p300 = pneg %p41
        %p301 = pneg %p65
        %p302 = pneg %p62
        %p303 = pneg %p86
        %p304 = pneg %p83
        %p305 = pneg %p107
        %p306 = pneg %p104
        %p307 = pneg %p128
        %p308 = pneg %p125
        %p309 = pneg %p149
        %p310 = pneg %p146
        %p311 = pneg %p170
        %p312 = pneg %p167
        %p313 = pneg %p191
        %p314 = pneg %p188
        %p315 = pneg %p212
        %p316 = pneg %p209
        %p317 = pneg %p238
        %p318 = pneg %p235
        %s319 = sand.u32 %s225, 1
        %s320 = scalar_lea.sflag [#allocation3], %s319
        %s321 = sand.u32 %s225, 1
        %s322 = scalar_lea.vmem [#allocation2], %s321
        %p323 = scmp.lt.s32.totalorder %s23, 1
        %s324 = scalar_select %p323, %s23, 1
        %s325 = smul.addr %s324, 8
        %s326 = scalar_lea.vmem %s0, %s325
        %v327 = vld [vmem:[%s326] sm:$0xff]
        %s328 = scalar_lea.vmem %s1, 24
        %v329 = vld [vmem:[%s328] sm:$0xff]
        %s330 = scalar_lea.vmem %s2, 24
        %v331 = vld [vmem:[%s330] sm:$0xff]
        %333 = vset.pattern.permute.xlu0 0
        %334 = vperm.xlu0 %333, %v329
        %v335 = vpop.permute.xlu0 %334
        %v337 = vmul.f32 %v335, %v327
        %s338 = scalar_lea.vmem %s3, 192
        %v339 = vld [vmem:[%s338] sm:$0xff]
        %v340 = vld [vmem:[%s338 + $0x8] sm:$0xff]
        %v341 = vld [vmem:[%s338 + $0x10] sm:$0xff]
        %v342 = vld [vmem:[%s338 + $0x18] sm:$0xff]
        %v343 = vld [vmem:[%s338 + $0x20] sm:$0xff]
        %v344 = vld [vmem:[%s338 + $0x28] sm:$0xff]
        %v345 = vld [vmem:[%s338 + $0x30] sm:$0xff]
        %v346 = vld [vmem:[%s338 + $0x38] sm:$0xff]
        %s347 = scalar_lea.vmem %s4, 192
        %v348 = vld [vmem:[%s347] sm:$0xff]
        %v349 = vld [vmem:[%s347 + $0x8] sm:$0xff]
        %v350 = vld [vmem:[%s347 + $0x10] sm:$0xff]
        %v351 = vld [vmem:[%s347 + $0x18] sm:$0xff]
        %v352 = vld [vmem:[%s347 + $0x20] sm:$0xff]
        %v353 = vld [vmem:[%s347 + $0x28] sm:$0xff]
        %v354 = vld [vmem:[%s347 + $0x30] sm:$0xff]
        %v355 = vld [vmem:[%s347 + $0x38] sm:$0xff]
        %357 = vset.pattern.permute.xlu0 0
        %358 = vperm.xlu0 %357, %v348
        %v359 = vpop.permute.xlu0 %358
        %362 = vset.pattern.permute.xlu0 0
        %363 = vperm.xlu0 %362, %v349
        %v364 = vpop.permute.xlu0 %363
        %367 = vset.pattern.permute.xlu0 0
        %368 = vperm.xlu0 %367, %v350
        %v369 = vpop.permute.xlu0 %368
        %372 = vset.pattern.permute.xlu0 0
        %373 = vperm.xlu0 %372, %v351
        %v374 = vpop.permute.xlu0 %373
        %377 = vset.pattern.permute.xlu0 0
        %378 = vperm.xlu0 %377, %v352
        %v379 = vpop.permute.xlu0 %378
        %382 = vset.pattern.permute.xlu0 0
        %383 = vperm.xlu0 %382, %v353
        %v384 = vpop.permute.xlu0 %383
        %387 = vset.pattern.permute.xlu0 0
        %388 = vperm.xlu0 %387, %v354
        %v389 = vpop.permute.xlu0 %388
        %392 = vset.pattern.permute.xlu0 0
        %393 = vperm.xlu0 %392, %v355
        %v394 = vpop.permute.xlu0 %393
        %vm396 = vcmask 64512
        %v398 = vsel %vm396, %v339, 0
        %v401 = vsel %vm396, %v340, 0
        %v404 = vsel %vm396, %v341, 0
        %v407 = vsel %vm396, %v342, 0
        %v410 = vsel %vm396, %v343, 0
        %v413 = vsel %vm396, %v344, 0
        %v416 = vsel %vm396, %v345, 0
        %v419 = vsel %vm396, %v346, 0
        %421 = vmatpush.msra.mxu0 0.0
        %422 = vmatpush.msra.mxu0 0.0
        %423 = vmatpush.msra.mxu0 0.0
        %424 = vmatpush.msra.mxu0 0.0
        %425 = vmatpush.msra.mxu0 0.0
        %426 = vmatpush.msra.mxu0 0.0
        %427 = vmatpush.msra.mxu0 0.0
        %428 = vmatpush.msra.mxu0 0.0
        %429 = vmatpush.msra.mxu0 0.0
        %430 = vmatpush.msra.mxu0 0.0
        %431 = vmatpush.msra.mxu0 0.0
        %432 = vmatpush.msra.mxu0 0.0
        %433 = vmatpush.msra.mxu0 0.0
        %434 = vmatpush.msra.mxu0 0.0
        %435 = vmatpush.msra.mxu0 0.0
        %436 = vmatpush.msra.mxu0 %v337
        %437 = vmatmul.f32.gmra.mxu0 %v398
        %v438 = vpop.f32.mrf.mxu0
        %v439 = vadd.f32 %v359, %v438
        %440 = vmatmul.f32.gmra.mxu0 %v401
        %v441 = vpop.f32.mrf.mxu0
        %v442 = vadd.f32 %v364, %v441
        %443 = vmatmul.f32.gmra.mxu0 %v404
        %v444 = vpop.f32.mrf.mxu0
        %v445 = vadd.f32 %v369, %v444
        %446 = vmatmul.f32.gmra.mxu0 %v407
        %v447 = vpop.f32.mrf.mxu0
        %v448 = vadd.f32 %v374, %v447
        %449 = vmatmul.f32.gmra.mxu0 %v410
        %v450 = vpop.f32.mrf.mxu0
        %v451 = vadd.f32 %v379, %v450
        %452 = vmatmul.f32.gmra.mxu0 %v413
        %v453 = vpop.f32.mrf.mxu0
        %v454 = vadd.f32 %v384, %v453
        %455 = vmatmul.f32.gmra.mxu0 %v416
        %v456 = vpop.f32.mrf.mxu0
        %v457 = vadd.f32 %v389, %v456
        %458 = vmatmul.f32.gmra.mxu0 %v419
        %v459 = vpop.f32.mrf.mxu0
        %v460 = vadd.f32 %v394, %v459
        %461 = vdwg.mxu0
        %v462 = vmax.f32 %v439, 0.0
        %v463 = vmax.f32 %v442, 0.0
        %v464 = vmax.f32 %v445, 0.0
        %v465 = vmax.f32 %v448, 0.0
        %v466 = vmax.f32 %v451, 0.0
        %v467 = vmax.f32 %v454, 0.0
        %v468 = vmax.f32 %v457, 0.0
        %v469 = vmax.f32 %v460, 0.0
        %v470 = vmin.f32 %v439, 0.0
        %v471 = vmin.f32 %v442, 0.0
        %v472 = vmin.f32 %v445, 0.0
        %v473 = vmin.f32 %v448, 0.0
        %v474 = vmin.f32 %v451, 0.0
        %v475 = vmin.f32 %v454, 0.0
        %v476 = vmin.f32 %v457, 0.0
        %v477 = vmin.f32 %v460, 0.0
        %v478 = vmul.f32 %v470, 0.01
        %v479 = vmul.f32 %v471, 0.01
        %v480 = vmul.f32 %v472, 0.01
        %v481 = vmul.f32 %v473, 0.01
        %v482 = vmul.f32 %v474, 0.01
        %v483 = vmul.f32 %v475, 0.01
        %v484 = vmul.f32 %v476, 0.01
        %v485 = vmul.f32 %v477, 0.01
        %v486 = vadd.f32 %v462, %v478
        %v487 = vadd.f32 %v463, %v479
        %v488 = vadd.f32 %v464, %v480
        %v489 = vadd.f32 %v465, %v481
        %v490 = vadd.f32 %v466, %v482
        %v491 = vadd.f32 %v467, %v483
        %v492 = vadd.f32 %v468, %v484
        %v493 = vadd.f32 %v469, %v485
        %s494 = scalar_lea.vmem %s5, 192
        %v495 = vld [vmem:[%s494] sm:$0xff]
        %v496 = vld [vmem:[%s494 + $0x8] sm:$0xff]
        %v497 = vld [vmem:[%s494 + $0x10] sm:$0xff]
        %v498 = vld [vmem:[%s494 + $0x18] sm:$0xff]
        %v499 = vld [vmem:[%s494 + $0x20] sm:$0xff]
        %v500 = vld [vmem:[%s494 + $0x28] sm:$0xff]
        %v501 = vld [vmem:[%s494 + $0x30] sm:$0xff]
        %v502 = vld [vmem:[%s494 + $0x38] sm:$0xff]
        %s503 = scalar_lea.vmem %s6, 192
        %v504 = vld [vmem:[%s503] sm:$0xff]
        %v505 = vld [vmem:[%s503 + $0x8] sm:$0xff]
        %v506 = vld [vmem:[%s503 + $0x10] sm:$0xff]
        %v507 = vld [vmem:[%s503 + $0x18] sm:$0xff]
        %v508 = vld [vmem:[%s503 + $0x20] sm:$0xff]
        %v509 = vld [vmem:[%s503 + $0x28] sm:$0xff]
        %v510 = vld [vmem:[%s503 + $0x30] sm:$0xff]
        %v511 = vld [vmem:[%s503 + $0x38] sm:$0xff]
        %513 = vset.pattern.permute.xlu0 0
        %514 = vperm.xlu0 %513, %v504
        %v515 = vpop.permute.xlu0 %514
        %518 = vset.pattern.permute.xlu0 0
        %519 = vperm.xlu0 %518, %v505
        %v520 = vpop.permute.xlu0 %519
        %523 = vset.pattern.permute.xlu0 0
        %524 = vperm.xlu0 %523, %v506
        %v525 = vpop.permute.xlu0 %524
        %528 = vset.pattern.permute.xlu0 0
        %529 = vperm.xlu0 %528, %v507
        %v530 = vpop.permute.xlu0 %529
        %533 = vset.pattern.permute.xlu0 0
        %534 = vperm.xlu0 %533, %v508
        %v535 = vpop.permute.xlu0 %534
        %538 = vset.pattern.permute.xlu0 0
        %539 = vperm.xlu0 %538, %v509
        %v540 = vpop.permute.xlu0 %539
        %543 = vset.pattern.permute.xlu0 0
        %544 = vperm.xlu0 %543, %v510
        %v545 = vpop.permute.xlu0 %544
        %548 = vset.pattern.permute.xlu0 0
        %549 = vperm.xlu0 %548, %v511
        %v550 = vpop.permute.xlu0 %549
        %vm552 = vcmask 523264
        %v554 = vsel %vm552, %v495, 0
        %v557 = vsel %vm552, %v496, 0
        %v560 = vsel %vm552, %v497, 0
        %v563 = vsel %vm552, %v498, 0
        %v566 = vsel %vm552, %v499, 0
        %v569 = vsel %vm552, %v500, 0
        %v572 = vsel %vm552, %v501, 0
        %v575 = vsel %vm552, %v502, 0
        %577 = vmatpush.msra.mxu0 0.0
        %578 = vmatpush.msra.mxu0 0.0
        %579 = vmatpush.msra.mxu0 0.0
        %580 = vmatpush.msra.mxu0 0.0
        %581 = vmatpush.msra.mxu0 0.0
        %582 = vmatpush.msra.mxu0 0.0
        %583 = vmatpush.msra.mxu0 0.0
        %584 = vmatpush.msra.mxu0 0.0
        %585 = vmatpush.msra.mxu0 %v493
        %586 = vmatpush.msra.mxu0 %v492
        %587 = vmatpush.msra.mxu0 %v491
        %588 = vmatpush.msra.mxu0 %v490
        %589 = vmatpush.msra.mxu0 %v489
        %590 = vmatpush.msra.mxu0 %v488
        %591 = vmatpush.msra.mxu0 %v487
        %592 = vmatpush.msra.mxu0 %v486
        %593 = vmatmul.f32.gmra.mxu0 %v554
        %v594 = vpop.f32.mrf.mxu0
        %v595 = vadd.f32 %v515, %v594
        %596 = vmatmul.f32.gmra.mxu0 %v557
        %v597 = vpop.f32.mrf.mxu0
        %v598 = vadd.f32 %v520, %v597
        %599 = vmatmul.f32.gmra.mxu0 %v560
        %v600 = vpop.f32.mrf.mxu0
        %v601 = vadd.f32 %v525, %v600
        %602 = vmatmul.f32.gmra.mxu0 %v563
        %v603 = vpop.f32.mrf.mxu0
        %v604 = vadd.f32 %v530, %v603
        %605 = vmatmul.f32.gmra.mxu0 %v566
        %v606 = vpop.f32.mrf.mxu0
        %v607 = vadd.f32 %v535, %v606
        %608 = vmatmul.f32.gmra.mxu0 %v569
        %v609 = vpop.f32.mrf.mxu0
        %v610 = vadd.f32 %v540, %v609
        %611 = vmatmul.f32.gmra.mxu0 %v572
        %v612 = vpop.f32.mrf.mxu0
        %v613 = vadd.f32 %v545, %v612
        %614 = vmatmul.f32.gmra.mxu0 %v575
        %v615 = vpop.f32.mrf.mxu0
        %v616 = vadd.f32 %v550, %v615
        %617 = vdwg.mxu0
        %v618 = vmax.f32 %v595, 0.0
        %v619 = vmax.f32 %v598, 0.0
        %v620 = vmax.f32 %v601, 0.0
        %v621 = vmax.f32 %v604, 0.0
        %v622 = vmax.f32 %v607, 0.0
        %v623 = vmax.f32 %v610, 0.0
        %v624 = vmax.f32 %v613, 0.0
        %v625 = vmax.f32 %v616, 0.0
        %v626 = vmin.f32 %v595, 0.0
        %v627 = vmin.f32 %v598, 0.0
        %v628 = vmin.f32 %v601, 0.0
        %v629 = vmin.f32 %v604, 0.0
        %v630 = vmin.f32 %v607, 0.0
        %v631 = vmin.f32 %v610, 0.0
        %v632 = vmin.f32 %v613, 0.0
        %v633 = vmin.f32 %v616, 0.0
        %v634 = vmul.f32 %v626, 0.01
        %v635 = vmul.f32 %v627, 0.01
        %v636 = vmul.f32 %v628, 0.01
        %v637 = vmul.f32 %v629, 0.01
        %v638 = vmul.f32 %v630, 0.01
        %v639 = vmul.f32 %v631, 0.01
        %v640 = vmul.f32 %v632, 0.01
        %v641 = vmul.f32 %v633, 0.01
        %v642 = vadd.f32 %v618, %v634
        %v643 = vadd.f32 %v619, %v635
        %v644 = vadd.f32 %v620, %v636
        %v645 = vadd.f32 %v621, %v637
        %v646 = vadd.f32 %v622, %v638
        %v647 = vadd.f32 %v623, %v639
        %v648 = vadd.f32 %v624, %v640
        %v649 = vadd.f32 %v625, %v641
        %s650 = scalar_lea.vmem %s7, 48
        %v651 = vld [vmem:[%s650] sm:$0xff]
        %v652 = vld [vmem:[%s650 + $0x8] sm:$0xff]
        %s653 = scalar_lea.vmem %s8, 48
        %v654 = vld [vmem:[%s653] sm:$0xff]
        %v655 = vld [vmem:[%s653 + $0x8] sm:$0xff]
        %657 = vset.pattern.permute.xlu0 0
        %658 = vperm.xlu0 %657, %v654
        %v659 = vpop.permute.xlu0 %658
        %662 = vset.pattern.permute.xlu0 0
        %663 = vperm.xlu0 %662, %v655
        %v664 = vpop.permute.xlu0 %663
        %v667 = vsel %vm552, %v651, 0
        %v670 = vsel %vm552, %v652, 0
        %672 = vmatpush.msra.mxu0 0.0
        %673 = vmatpush.msra.mxu0 0.0
        %674 = vmatpush.msra.mxu0 0.0
        %675 = vmatpush.msra.mxu0 0.0
        %676 = vmatpush.msra.mxu0 0.0
        %677 = vmatpush.msra.mxu0 0.0
        %678 = vmatpush.msra.mxu0 0.0
        %679 = vmatpush.msra.mxu0 0.0
        %680 = vmatpush.msra.mxu0 %v649
        %681 = vmatpush.msra.mxu0 %v648
        %682 = vmatpush.msra.mxu0 %v647
        %683 = vmatpush.msra.mxu0 %v646
        %684 = vmatpush.msra.mxu0 %v645
        %685 = vmatpush.msra.mxu0 %v644
        %686 = vmatpush.msra.mxu0 %v643
        %687 = vmatpush.msra.mxu0 %v642
        %688 = vmatmul.f32.gmra.mxu0 %v667
        %v689 = vpop.f32.mrf.mxu0
        %v690 = vadd.f32 %v659, %v689
        %691 = vmatmul.f32.gmra.mxu0 %v670
        %v692 = vpop.f32.mrf.mxu0
        %v693 = vadd.f32 %v664, %v692
        %694 = vdwg.mxu0
        %v695 = vtanh.pop %v690
        %697 = vset.pattern.permute.xlu0 0
        %698 = vperm.xlu0 %697, %v331
        %v699 = vpop.permute.xlu0 %698
        %v701 = vmul.f32 %v695, %v699
        %v702 = vsub.f32 %v327, %v693
        %v703 = vmul.f32 %v699, %v702
        %v704 = vsub.f32 0.0, %v701
        %v705 = vmul.f32 %v704, 1.442695
        %v706 = vpow.pop %v705
        %v707 = vmul.f32 %v703, %v706
        %v708 = vadd.f32 %v707, %v337
        %v709 = vadd.f32 %v701, 0.0
        %s710 = scalar_lea.vmem %s1, 16
        %v711 = vld [vmem:[%s710] sm:$0xff]
        %s712 = scalar_lea.vmem %s2, 16
        %v713 = vld [vmem:[%s712] sm:$0xff]
        %715 = vset.pattern.permute.xlu0 0
        %716 = vperm.xlu0 %715, %v711
        %v717 = vpop.permute.xlu0 %716
        %v719 = vmul.f32 %v717, %v708
        %s720 = scalar_lea.vmem %s3, 128
        %v721 = vld [vmem:[%s720] sm:$0xff]
        %v722 = vld [vmem:[%s720 + $0x8] sm:$0xff]
        %v723 = vld [vmem:[%s720 + $0x10] sm:$0xff]
        %v724 = vld [vmem:[%s720 + $0x18] sm:$0xff]
        %v725 = vld [vmem:[%s720 + $0x20] sm:$0xff]
        %v726 = vld [vmem:[%s720 + $0x28] sm:$0xff]
        %v727 = vld [vmem:[%s720 + $0x30] sm:$0xff]
        %v728 = vld [vmem:[%s720 + $0x38] sm:$0xff]
        %s729 = scalar_lea.vmem %s4, 128
        %v730 = vld [vmem:[%s729] sm:$0xff]
        %v731 = vld [vmem:[%s729 + $0x8] sm:$0xff]
        %v732 = vld [vmem:[%s729 + $0x10] sm:$0xff]
        %v733 = vld [vmem:[%s729 + $0x18] sm:$0xff]
        %v734 = vld [vmem:[%s729 + $0x20] sm:$0xff]
        %v735 = vld [vmem:[%s729 + $0x28] sm:$0xff]
        %v736 = vld [vmem:[%s729 + $0x30] sm:$0xff]
        %v737 = vld [vmem:[%s729 + $0x38] sm:$0xff]
        %739 = vset.pattern.permute.xlu0 0
        %740 = vperm.xlu0 %739, %v730
        %v741 = vpop.permute.xlu0 %740
        %744 = vset.pattern.permute.xlu0 0
        %745 = vperm.xlu0 %744, %v731
        %v746 = vpop.permute.xlu0 %745
        %749 = vset.pattern.permute.xlu0 0
        %750 = vperm.xlu0 %749, %v732
        %v751 = vpop.permute.xlu0 %750
        %754 = vset.pattern.permute.xlu0 0
        %755 = vperm.xlu0 %754, %v733
        %v756 = vpop.permute.xlu0 %755
        %759 = vset.pattern.permute.xlu0 0
        %760 = vperm.xlu0 %759, %v734
        %v761 = vpop.permute.xlu0 %760
        %764 = vset.pattern.permute.xlu0 0
        %765 = vperm.xlu0 %764, %v735
        %v766 = vpop.permute.xlu0 %765
        %769 = vset.pattern.permute.xlu0 0
        %770 = vperm.xlu0 %769, %v736
        %v771 = vpop.permute.xlu0 %770
        %774 = vset.pattern.permute.xlu0 0
        %775 = vperm.xlu0 %774, %v737
        %v776 = vpop.permute.xlu0 %775
        %v779 = vsel %vm396, %v721, 0
        %v782 = vsel %vm396, %v722, 0
        %v785 = vsel %vm396, %v723, 0
        %v788 = vsel %vm396, %v724, 0
        %v791 = vsel %vm396, %v725, 0
        %v794 = vsel %vm396, %v726, 0
        %v797 = vsel %vm396, %v727, 0
        %v800 = vsel %vm396, %v728, 0
        %802 = vmatpush.msra.mxu0 0.0
        %803 = vmatpush.msra.mxu0 0.0
        %804 = vmatpush.msra.mxu0 0.0
        %805 = vmatpush.msra.mxu0 0.0
        %806 = vmatpush.msra.mxu0 0.0
        %807 = vmatpush.msra.mxu0 0.0
        %808 = vmatpush.msra.mxu0 0.0
        %809 = vmatpush.msra.mxu0 0.0
        %810 = vmatpush.msra.mxu0 0.0
        %811 = vmatpush.msra.mxu0 0.0
        %812 = vmatpush.msra.mxu0 0.0
        %813 = vmatpush.msra.mxu0 0.0
        %814 = vmatpush.msra.mxu0 0.0
        %815 = vmatpush.msra.mxu0 0.0
        %816 = vmatpush.msra.mxu0 0.0
        %817 = vmatpush.msra.mxu0 %v719
        %818 = vmatmul.f32.gmra.mxu0 %v779
        %v819 = vpop.f32.mrf.mxu0
        %v820 = vadd.f32 %v741, %v819
        %821 = vmatmul.f32.gmra.mxu0 %v782
        %v822 = vpop.f32.mrf.mxu0
        %v823 = vadd.f32 %v746, %v822
        %824 = vmatmul.f32.gmra.mxu0 %v785
        %v825 = vpop.f32.mrf.mxu0
        %v826 = vadd.f32 %v751, %v825
        %827 = vmatmul.f32.gmra.mxu0 %v788
        %v828 = vpop.f32.mrf.mxu0
        %v829 = vadd.f32 %v756, %v828
        %830 = vmatmul.f32.gmra.mxu0 %v791
        %v831 = vpop.f32.mrf.mxu0
        %v832 = vadd.f32 %v761, %v831
        %833 = vmatmul.f32.gmra.mxu0 %v794
        %v834 = vpop.f32.mrf.mxu0
        %v835 = vadd.f32 %v766, %v834
        %836 = vmatmul.f32.gmra.mxu0 %v797
        %v837 = vpop.f32.mrf.mxu0
        %v838 = vadd.f32 %v771, %v837
        %839 = vmatmul.f32.gmra.mxu0 %v800
        %v840 = vpop.f32.mrf.mxu0
        %v841 = vadd.f32 %v776, %v840
        %842 = vdwg.mxu0
        %v843 = vmax.f32 %v820, 0.0
        %v844 = vmax.f32 %v823, 0.0
        %v845 = vmax.f32 %v826, 0.0
        %v846 = vmax.f32 %v829, 0.0
        %v847 = vmax.f32 %v832, 0.0
        %v848 = vmax.f32 %v835, 0.0
        %v849 = vmax.f32 %v838, 0.0
        %v850 = vmax.f32 %v841, 0.0
        %v851 = vmin.f32 %v820, 0.0
        %v852 = vmin.f32 %v823, 0.0
        %v853 = vmin.f32 %v826, 0.0
        %v854 = vmin.f32 %v829, 0.0
        %v855 = vmin.f32 %v832, 0.0
        %v856 = vmin.f32 %v835, 0.0
        %v857 = vmin.f32 %v838, 0.0
        %v858 = vmin.f32 %v841, 0.0
        %v859 = vmul.f32 %v851, 0.01
        %v860 = vmul.f32 %v852, 0.01
        %v861 = vmul.f32 %v853, 0.01
        %v862 = vmul.f32 %v854, 0.01
        %v863 = vmul.f32 %v855, 0.01
        %v864 = vmul.f32 %v856, 0.01
        %v865 = vmul.f32 %v857, 0.01
        %v866 = vmul.f32 %v858, 0.01
        %v867 = vadd.f32 %v843, %v859
        %v868 = vadd.f32 %v844, %v860
        %v869 = vadd.f32 %v845, %v861
        %v870 = vadd.f32 %v846, %v862
        %v871 = vadd.f32 %v847, %v863
        %v872 = vadd.f32 %v848, %v864
        %v873 = vadd.f32 %v849, %v865
        %v874 = vadd.f32 %v850, %v866
        %s875 = scalar_lea.vmem %s5, 128
        %v876 = vld [vmem:[%s875] sm:$0xff]
        %v877 = vld [vmem:[%s875 + $0x8] sm:$0xff]
        %v878 = vld [vmem:[%s875 + $0x10] sm:$0xff]
        %v879 = vld [vmem:[%s875 + $0x18] sm:$0xff]
        %v880 = vld [vmem:[%s875 + $0x20] sm:$0xff]
        %v881 = vld [vmem:[%s875 + $0x28] sm:$0xff]
        %v882 = vld [vmem:[%s875 + $0x30] sm:$0xff]
        %v883 = vld [vmem:[%s875 + $0x38] sm:$0xff]
        %s884 = scalar_lea.vmem %s6, 128
        %v885 = vld [vmem:[%s884] sm:$0xff]
        %v886 = vld [vmem:[%s884 + $0x8] sm:$0xff]
        %v887 = vld [vmem:[%s884 + $0x10] sm:$0xff]
        %v888 = vld [vmem:[%s884 + $0x18] sm:$0xff]
        %v889 = vld [vmem:[%s884 + $0x20] sm:$0xff]
        %v890 = vld [vmem:[%s884 + $0x28] sm:$0xff]
        %v891 = vld [vmem:[%s884 + $0x30] sm:$0xff]
        %v892 = vld [vmem:[%s884 + $0x38] sm:$0xff]
        %894 = vset.pattern.permute.xlu0 0
        %895 = vperm.xlu0 %894, %v885
        %v896 = vpop.permute.xlu0 %895
        %899 = vset.pattern.permute.xlu0 0
        %900 = vperm.xlu0 %899, %v886
        %v901 = vpop.permute.xlu0 %900
        %904 = vset.pattern.permute.xlu0 0
        %905 = vperm.xlu0 %904, %v887
        %v906 = vpop.permute.xlu0 %905
        %909 = vset.pattern.permute.xlu0 0
        %910 = vperm.xlu0 %909, %v888
        %v911 = vpop.permute.xlu0 %910
        %914 = vset.pattern.permute.xlu0 0
        %915 = vperm.xlu0 %914, %v889
        %v916 = vpop.permute.xlu0 %915
        %919 = vset.pattern.permute.xlu0 0
        %920 = vperm.xlu0 %919, %v890
        %v921 = vpop.permute.xlu0 %920
        %924 = vset.pattern.permute.xlu0 0
        %925 = vperm.xlu0 %924, %v891
        %v926 = vpop.permute.xlu0 %925
        %929 = vset.pattern.permute.xlu0 0
        %930 = vperm.xlu0 %929, %v892
        %v931 = vpop.permute.xlu0 %930
        %v934 = vsel %vm552, %v876, 0
        %v937 = vsel %vm552, %v877, 0
        %v940 = vsel %vm552, %v878, 0
        %v943 = vsel %vm552, %v879, 0
        %v946 = vsel %vm552, %v880, 0
        %v949 = vsel %vm552, %v881, 0
        %v952 = vsel %vm552, %v882, 0
        %v955 = vsel %vm552, %v883, 0
        %957 = vmatpush.msra.mxu0 0.0
        %958 = vmatpush.msra.mxu0 0.0
        %959 = vmatpush.msra.mxu0 0.0
        %960 = vmatpush.msra.mxu0 0.0
        %961 = vmatpush.msra.mxu0 0.0
        %962 = vmatpush.msra.mxu0 0.0
        %963 = vmatpush.msra.mxu0 0.0
        %964 = vmatpush.msra.mxu0 0.0
        %965 = vmatpush.msra.mxu0 %v874
        %966 = vmatpush.msra.mxu0 %v873
        %967 = vmatpush.msra.mxu0 %v872
        %968 = vmatpush.msra.mxu0 %v871
        %969 = vmatpush.msra.mxu0 %v870
        %970 = vmatpush.msra.mxu0 %v869
        %971 = vmatpush.msra.mxu0 %v868
        %972 = vmatpush.msra.mxu0 %v867
        %973 = vmatmul.f32.gmra.mxu0 %v934
        %v974 = vpop.f32.mrf.mxu0
        %v975 = vadd.f32 %v896, %v974
        %976 = vmatmul.f32.gmra.mxu0 %v937
        %v977 = vpop.f32.mrf.mxu0
        %v978 = vadd.f32 %v901, %v977
        %979 = vmatmul.f32.gmra.mxu0 %v940
        %v980 = vpop.f32.mrf.mxu0
        %v981 = vadd.f32 %v906, %v980
        %982 = vmatmul.f32.gmra.mxu0 %v943
        %v983 = vpop.f32.mrf.mxu0
        %v984 = vadd.f32 %v911, %v983
        %985 = vmatmul.f32.gmra.mxu0 %v946
        %v986 = vpop.f32.mrf.mxu0
        %v987 = vadd.f32 %v916, %v986
        %988 = vmatmul.f32.gmra.mxu0 %v949
        %v989 = vpop.f32.mrf.mxu0
        %v990 = vadd.f32 %v921, %v989
        %991 = vmatmul.f32.gmra.mxu0 %v952
        %v992 = vpop.f32.mrf.mxu0
        %v993 = vadd.f32 %v926, %v992
        %994 = vmatmul.f32.gmra.mxu0 %v955
        %v995 = vpop.f32.mrf.mxu0
        %v996 = vadd.f32 %v931, %v995
        %997 = vdwg.mxu0
        %v998 = vmax.f32 %v975, 0.0
        %v999 = vmax.f32 %v978, 0.0
        %v1000 = vmax.f32 %v981, 0.0
        %v1001 = vmax.f32 %v984, 0.0
        %v1002 = vmax.f32 %v987, 0.0
        %v1003 = vmax.f32 %v990, 0.0
        %v1004 = vmax.f32 %v993, 0.0
        %v1005 = vmax.f32 %v996, 0.0
        %v1006 = vmin.f32 %v975, 0.0
        %v1007 = vmin.f32 %v978, 0.0
        %v1008 = vmin.f32 %v981, 0.0
        %v1009 = vmin.f32 %v984, 0.0
        %v1010 = vmin.f32 %v987, 0.0
        %v1011 = vmin.f32 %v990, 0.0
        %v1012 = vmin.f32 %v993, 0.0
        %v1013 = vmin.f32 %v996, 0.0
        %v1014 = vmul.f32 %v1006, 0.01
        %v1015 = vmul.f32 %v1007, 0.01
        %v1016 = vmul.f32 %v1008, 0.01
        %v1017 = vmul.f32 %v1009, 0.01
        %v1018 = vmul.f32 %v1010, 0.01
        %v1019 = vmul.f32 %v1011, 0.01
        %v1020 = vmul.f32 %v1012, 0.01
        %v1021 = vmul.f32 %v1013, 0.01
        %v1022 = vadd.f32 %v998, %v1014
        %v1023 = vadd.f32 %v999, %v1015
        %v1024 = vadd.f32 %v1000, %v1016
        %v1025 = vadd.f32 %v1001, %v1017
        %v1026 = vadd.f32 %v1002, %v1018
        %v1027 = vadd.f32 %v1003, %v1019
        %v1028 = vadd.f32 %v1004, %v1020
        %v1029 = vadd.f32 %v1005, %v1021
        %s1030 = scalar_lea.vmem %s7, 32
        %v1031 = vld [vmem:[%s1030] sm:$0xff]
        %v1032 = vld [vmem:[%s1030 + $0x8] sm:$0xff]
        %s1033 = scalar_lea.vmem %s8, 32
        %v1034 = vld [vmem:[%s1033] sm:$0xff]
        %v1035 = vld [vmem:[%s1033 + $0x8] sm:$0xff]
        %1037 = vset.pattern.permute.xlu0 0
        %1038 = vperm.xlu0 %1037, %v1034
        %v1039 = vpop.permute.xlu0 %1038
        %1042 = vset.pattern.permute.xlu0 0
        %1043 = vperm.xlu0 %1042, %v1035
        %v1044 = vpop.permute.xlu0 %1043
        %v1047 = vsel %vm552, %v1031, 0
        %v1050 = vsel %vm552, %v1032, 0
        %1052 = vmatpush.msra.mxu0 0.0
        %1053 = vmatpush.msra.mxu0 0.0
        %1054 = vmatpush.msra.mxu0 0.0
        %1055 = vmatpush.msra.mxu0 0.0
        %1056 = vmatpush.msra.mxu0 0.0
        %1057 = vmatpush.msra.mxu0 0.0
        %1058 = vmatpush.msra.mxu0 0.0
        %1059 = vmatpush.msra.mxu0 0.0
        %1060 = vmatpush.msra.mxu0 %v1029
        %1061 = vmatpush.msra.mxu0 %v1028
        %1062 = vmatpush.msra.mxu0 %v1027
        %1063 = vmatpush.msra.mxu0 %v1026
        %1064 = vmatpush.msra.mxu0 %v1025
        %1065 = vmatpush.msra.mxu0 %v1024
        %1066 = vmatpush.msra.mxu0 %v1023
        %1067 = vmatpush.msra.mxu0 %v1022
        %1068 = vmatmul.f32.gmra.mxu0 %v1047
        %v1069 = vpop.f32.mrf.mxu0
        %v1070 = vadd.f32 %v1039, %v1069
        %1071 = vmatmul.f32.gmra.mxu0 %v1050
        %v1072 = vpop.f32.mrf.mxu0
        %v1073 = vadd.f32 %v1044, %v1072
        %1074 = vdwg.mxu0
        %v1075 = vtanh.pop %v1070
        %1077 = vset.pattern.permute.xlu0 0
        %1078 = vperm.xlu0 %1077, %v713
        %v1079 = vpop.permute.xlu0 %1078
        %v1081 = vmul.f32 %v1075, %v1079
        %v1082 = vsub.f32 %v708, %v1073
        %v1083 = vmul.f32 %v1079, %v1082
        %v1084 = vsub.f32 0.0, %v1081
        %v1085 = vmul.f32 %v1084, 1.442695
        %v1086 = vpow.pop %v1085
        %v1087 = vmul.f32 %v1083, %v1086
        %v1088 = vadd.f32 %v1087, %v719
        %v1089 = vadd.f32 %v709, %v1081
        %s1090 = scalar_lea.vmem %s1, 8
        %v1091 = vld [vmem:[%s1090] sm:$0xff]
        %s1092 = scalar_lea.vmem %s2, 8
        %v1093 = vld [vmem:[%s1092] sm:$0xff]
        %1095 = vset.pattern.permute.xlu0 0
        %1096 = vperm.xlu0 %1095, %v1091
        %v1097 = vpop.permute.xlu0 %1096
        %v1099 = vmul.f32 %v1097, %v1088
        %s1100 = scalar_lea.vmem %s3, 64
        %v1101 = vld [vmem:[%s1100] sm:$0xff]
        %v1102 = vld [vmem:[%s1100 + $0x8] sm:$0xff]
        %v1103 = vld [vmem:[%s1100 + $0x10] sm:$0xff]
        %v1104 = vld [vmem:[%s1100 + $0x18] sm:$0xff]
        %v1105 = vld [vmem:[%s1100 + $0x20] sm:$0xff]
        %v1106 = vld [vmem:[%s1100 + $0x28] sm:$0xff]
        %v1107 = vld [vmem:[%s1100 + $0x30] sm:$0xff]
        %v1108 = vld [vmem:[%s1100 + $0x38] sm:$0xff]
        %s1109 = scalar_lea.vmem %s4, 64
        %v1110 = vld [vmem:[%s1109] sm:$0xff]
        %v1111 = vld [vmem:[%s1109 + $0x8] sm:$0xff]
        %v1112 = vld [vmem:[%s1109 + $0x10] sm:$0xff]
        %v1113 = vld [vmem:[%s1109 + $0x18] sm:$0xff]
        %v1114 = vld [vmem:[%s1109 + $0x20] sm:$0xff]
        %v1115 = vld [vmem:[%s1109 + $0x28] sm:$0xff]
        %v1116 = vld [vmem:[%s1109 + $0x30] sm:$0xff]
        %v1117 = vld [vmem:[%s1109 + $0x38] sm:$0xff]
        %1119 = vset.pattern.permute.xlu0 0
        %1120 = vperm.xlu0 %1119, %v1110
        %v1121 = vpop.permute.xlu0 %1120
        %1124 = vset.pattern.permute.xlu0 0
        %1125 = vperm.xlu0 %1124, %v1111
        %v1126 = vpop.permute.xlu0 %1125
        %1129 = vset.pattern.permute.xlu0 0
        %1130 = vperm.xlu0 %1129, %v1112
        %v1131 = vpop.permute.xlu0 %1130
        %1134 = vset.pattern.permute.xlu0 0
        %1135 = vperm.xlu0 %1134, %v1113
        %v1136 = vpop.permute.xlu0 %1135
        %1139 = vset.pattern.permute.xlu0 0
        %1140 = vperm.xlu0 %1139, %v1114
        %v1141 = vpop.permute.xlu0 %1140
        %1144 = vset.pattern.permute.xlu0 0
        %1145 = vperm.xlu0 %1144, %v1115
        %v1146 = vpop.permute.xlu0 %1145
        %1149 = vset.pattern.permute.xlu0 0
        %1150 = vperm.xlu0 %1149, %v1116
        %v1151 = vpop.permute.xlu0 %1150
        %1154 = vset.pattern.permute.xlu0 0
        %1155 = vperm.xlu0 %1154, %v1117
        %v1156 = vpop.permute.xlu0 %1155
        %v1159 = vsel %vm396, %v1101, 0
        %v1162 = vsel %vm396, %v1102, 0
        %v1165 = vsel %vm396, %v1103, 0
        %v1168 = vsel %vm396, %v1104, 0
        %v1171 = vsel %vm396, %v1105, 0
        %v1174 = vsel %vm396, %v1106, 0
        %v1177 = vsel %vm396, %v1107, 0
        %v1180 = vsel %vm396, %v1108, 0
        %1182 = vmatpush.msra.mxu0 0.0
        %1183 = vmatpush.msra.mxu0 0.0
        %1184 = vmatpush.msra.mxu0 0.0
        %1185 = vmatpush.msra.mxu0 0.0
        %1186 = vmatpush.msra.mxu0 0.0
        %1187 = vmatpush.msra.mxu0 0.0
        %1188 = vmatpush.msra.mxu0 0.0
        %1189 = vmatpush.msra.mxu0 0.0
        %1190 = vmatpush.msra.mxu0 0.0
        %1191 = vmatpush.msra.mxu0 0.0
        %1192 = vmatpush.msra.mxu0 0.0
        %1193 = vmatpush.msra.mxu0 0.0
        %1194 = vmatpush.msra.mxu0 0.0
        %1195 = vmatpush.msra.mxu0 0.0
        %1196 = vmatpush.msra.mxu0 0.0
        %1197 = vmatpush.msra.mxu0 %v1099
        %1198 = vmatmul.f32.gmra.mxu0 %v1159
        %v1199 = vpop.f32.mrf.mxu0
        %v1200 = vadd.f32 %v1121, %v1199
        %1201 = vmatmul.f32.gmra.mxu0 %v1162
        %v1202 = vpop.f32.mrf.mxu0
        %v1203 = vadd.f32 %v1126, %v1202
        %1204 = vmatmul.f32.gmra.mxu0 %v1165
        %v1205 = vpop.f32.mrf.mxu0
        %v1206 = vadd.f32 %v1131, %v1205
        %1207 = vmatmul.f32.gmra.mxu0 %v1168
        %v1208 = vpop.f32.mrf.mxu0
        %v1209 = vadd.f32 %v1136, %v1208
        %1210 = vmatmul.f32.gmra.mxu0 %v1171
        %v1211 = vpop.f32.mrf.mxu0
        %v1212 = vadd.f32 %v1141, %v1211
        %1213 = vmatmul.f32.gmra.mxu0 %v1174
        %v1214 = vpop.f32.mrf.mxu0
        %v1215 = vadd.f32 %v1146, %v1214
        %1216 = vmatmul.f32.gmra.mxu0 %v1177
        %v1217 = vpop.f32.mrf.mxu0
        %v1218 = vadd.f32 %v1151, %v1217
        %1219 = vmatmul.f32.gmra.mxu0 %v1180
        %v1220 = vpop.f32.mrf.mxu0
        %v1221 = vadd.f32 %v1156, %v1220
        %1222 = vdwg.mxu0
        %v1223 = vmax.f32 %v1200, 0.0
        %v1224 = vmax.f32 %v1203, 0.0
        %v1225 = vmax.f32 %v1206, 0.0
        %v1226 = vmax.f32 %v1209, 0.0
        %v1227 = vmax.f32 %v1212, 0.0
        %v1228 = vmax.f32 %v1215, 0.0
        %v1229 = vmax.f32 %v1218, 0.0
        %v1230 = vmax.f32 %v1221, 0.0
        %v1231 = vmin.f32 %v1200, 0.0
        %v1232 = vmin.f32 %v1203, 0.0
        %v1233 = vmin.f32 %v1206, 0.0
        %v1234 = vmin.f32 %v1209, 0.0
        %v1235 = vmin.f32 %v1212, 0.0
        %v1236 = vmin.f32 %v1215, 0.0
        %v1237 = vmin.f32 %v1218, 0.0
        %v1238 = vmin.f32 %v1221, 0.0
        %v1239 = vmul.f32 %v1231, 0.01
        %v1240 = vmul.f32 %v1232, 0.01
        %v1241 = vmul.f32 %v1233, 0.01
        %v1242 = vmul.f32 %v1234, 0.01
        %v1243 = vmul.f32 %v1235, 0.01
        %v1244 = vmul.f32 %v1236, 0.01
        %v1245 = vmul.f32 %v1237, 0.01
        %v1246 = vmul.f32 %v1238, 0.01
        %v1247 = vadd.f32 %v1223, %v1239
        %v1248 = vadd.f32 %v1224, %v1240
        %v1249 = vadd.f32 %v1225, %v1241
        %v1250 = vadd.f32 %v1226, %v1242
        %v1251 = vadd.f32 %v1227, %v1243
        %v1252 = vadd.f32 %v1228, %v1244
        %v1253 = vadd.f32 %v1229, %v1245
        %v1254 = vadd.f32 %v1230, %v1246
        %s1255 = scalar_lea.vmem %s5, 64
        %v1256 = vld [vmem:[%s1255] sm:$0xff]
        %v1257 = vld [vmem:[%s1255 + $0x8] sm:$0xff]
        %v1258 = vld [vmem:[%s1255 + $0x10] sm:$0xff]
        %v1259 = vld [vmem:[%s1255 + $0x18] sm:$0xff]
        %v1260 = vld [vmem:[%s1255 + $0x20] sm:$0xff]
        %v1261 = vld [vmem:[%s1255 + $0x28] sm:$0xff]
        %v1262 = vld [vmem:[%s1255 + $0x30] sm:$0xff]
        %v1263 = vld [vmem:[%s1255 + $0x38] sm:$0xff]
        %s1264 = scalar_lea.vmem %s6, 64
        %v1265 = vld [vmem:[%s1264] sm:$0xff]
        %v1266 = vld [vmem:[%s1264 + $0x8] sm:$0xff]
        %v1267 = vld [vmem:[%s1264 + $0x10] sm:$0xff]
        %v1268 = vld [vmem:[%s1264 + $0x18] sm:$0xff]
        %v1269 = vld [vmem:[%s1264 + $0x20] sm:$0xff]
        %v1270 = vld [vmem:[%s1264 + $0x28] sm:$0xff]
        %v1271 = vld [vmem:[%s1264 + $0x30] sm:$0xff]
        %v1272 = vld [vmem:[%s1264 + $0x38] sm:$0xff]
        %1274 = vset.pattern.permute.xlu0 0
        %1275 = vperm.xlu0 %1274, %v1265
        %v1276 = vpop.permute.xlu0 %1275
        %1279 = vset.pattern.permute.xlu0 0
        %1280 = vperm.xlu0 %1279, %v1266
        %v1281 = vpop.permute.xlu0 %1280
        %1284 = vset.pattern.permute.xlu0 0
        %1285 = vperm.xlu0 %1284, %v1267
        %v1286 = vpop.permute.xlu0 %1285
        %1289 = vset.pattern.permute.xlu0 0
        %1290 = vperm.xlu0 %1289, %v1268
        %v1291 = vpop.permute.xlu0 %1290
        %1294 = vset.pattern.permute.xlu0 0
        %1295 = vperm.xlu0 %1294, %v1269
        %v1296 = vpop.permute.xlu0 %1295
        %1299 = vset.pattern.permute.xlu0 0
        %1300 = vperm.xlu0 %1299, %v1270
        %v1301 = vpop.permute.xlu0 %1300
        %1304 = vset.pattern.permute.xlu0 0
        %1305 = vperm.xlu0 %1304, %v1271
        %v1306 = vpop.permute.xlu0 %1305
        %1309 = vset.pattern.permute.xlu0 0
        %1310 = vperm.xlu0 %1309, %v1272
        %v1311 = vpop.permute.xlu0 %1310
        %v1314 = vsel %vm552, %v1256, 0
        %v1317 = vsel %vm552, %v1257, 0
        %v1320 = vsel %vm552, %v1258, 0
        %v1323 = vsel %vm552, %v1259, 0
        %v1326 = vsel %vm552, %v1260, 0
        %v1329 = vsel %vm552, %v1261, 0
        %v1332 = vsel %vm552, %v1262, 0
        %v1335 = vsel %vm552, %v1263, 0
        %1337 = vmatpush.msra.mxu0 0.0
        %1338 = vmatpush.msra.mxu0 0.0
        %1339 = vmatpush.msra.mxu0 0.0
        %1340 = vmatpush.msra.mxu0 0.0
        %1341 = vmatpush.msra.mxu0 0.0
        %1342 = vmatpush.msra.mxu0 0.0
        %1343 = vmatpush.msra.mxu0 0.0
        %1344 = vmatpush.msra.mxu0 0.0
        %1345 = vmatpush.msra.mxu0 %v1254
        %1346 = vmatpush.msra.mxu0 %v1253
        %1347 = vmatpush.msra.mxu0 %v1252
        %1348 = vmatpush.msra.mxu0 %v1251
        %1349 = vmatpush.msra.mxu0 %v1250
        %1350 = vmatpush.msra.mxu0 %v1249
        %1351 = vmatpush.msra.mxu0 %v1248
        %1352 = vmatpush.msra.mxu0 %v1247
        %1353 = vmatmul.f32.gmra.mxu0 %v1314
        %v1354 = vpop.f32.mrf.mxu0
        %v1355 = vadd.f32 %v1276, %v1354
        %1356 = vmatmul.f32.gmra.mxu0 %v1317
        %v1357 = vpop.f32.mrf.mxu0
        %v1358 = vadd.f32 %v1281, %v1357
        %1359 = vmatmul.f32.gmra.mxu0 %v1320
        %v1360 = vpop.f32.mrf.mxu0
        %v1361 = vadd.f32 %v1286, %v1360
        %1362 = vmatmul.f32.gmra.mxu0 %v1323
        %v1363 = vpop.f32.mrf.mxu0
        %v1364 = vadd.f32 %v1291, %v1363
        %1365 = vmatmul.f32.gmra.mxu0 %v1326
        %v1366 = vpop.f32.mrf.mxu0
        %v1367 = vadd.f32 %v1296, %v1366
        %1368 = vmatmul.f32.gmra.mxu0 %v1329
        %v1369 = vpop.f32.mrf.mxu0
        %v1370 = vadd.f32 %v1301, %v1369
        %1371 = vmatmul.f32.gmra.mxu0 %v1332
        %v1372 = vpop.f32.mrf.mxu0
        %v1373 = vadd.f32 %v1306, %v1372
        %1374 = vmatmul.f32.gmra.mxu0 %v1335
        %v1375 = vpop.f32.mrf.mxu0
        %v1376 = vadd.f32 %v1311, %v1375
        %1377 = vdwg.mxu0
        %v1378 = vmax.f32 %v1355, 0.0
        %v1379 = vmax.f32 %v1358, 0.0
        %v1380 = vmax.f32 %v1361, 0.0
        %v1381 = vmax.f32 %v1364, 0.0
        %v1382 = vmax.f32 %v1367, 0.0
        %v1383 = vmax.f32 %v1370, 0.0
        %v1384 = vmax.f32 %v1373, 0.0
        %v1385 = vmax.f32 %v1376, 0.0
        %v1386 = vmin.f32 %v1355, 0.0
        %v1387 = vmin.f32 %v1358, 0.0
        %v1388 = vmin.f32 %v1361, 0.0
        %v1389 = vmin.f32 %v1364, 0.0
        %v1390 = vmin.f32 %v1367, 0.0
        %v1391 = vmin.f32 %v1370, 0.0
        %v1392 = vmin.f32 %v1373, 0.0
        %v1393 = vmin.f32 %v1376, 0.0
        %v1394 = vmul.f32 %v1386, 0.01
        %v1395 = vmul.f32 %v1387, 0.01
        %v1396 = vmul.f32 %v1388, 0.01
        %v1397 = vmul.f32 %v1389, 0.01
        %v1398 = vmul.f32 %v1390, 0.01
        %v1399 = vmul.f32 %v1391, 0.01
        %v1400 = vmul.f32 %v1392, 0.01
        %v1401 = vmul.f32 %v1393, 0.01
        %v1402 = vadd.f32 %v1378, %v1394
        %v1403 = vadd.f32 %v1379, %v1395
        %v1404 = vadd.f32 %v1380, %v1396
        %v1405 = vadd.f32 %v1381, %v1397
        %v1406 = vadd.f32 %v1382, %v1398
        %v1407 = vadd.f32 %v1383, %v1399
        %v1408 = vadd.f32 %v1384, %v1400
        %v1409 = vadd.f32 %v1385, %v1401
        %s1410 = scalar_lea.vmem %s7, 16
        %v1411 = vld [vmem:[%s1410] sm:$0xff]
        %v1412 = vld [vmem:[%s1410 + $0x8] sm:$0xff]
        %s1413 = scalar_lea.vmem %s8, 16
        %v1414 = vld [vmem:[%s1413] sm:$0xff]
        %v1415 = vld [vmem:[%s1413 + $0x8] sm:$0xff]
        %1417 = vset.pattern.permute.xlu0 0
        %1418 = vperm.xlu0 %1417, %v1414
        %v1419 = vpop.permute.xlu0 %1418
        %1422 = vset.pattern.permute.xlu0 0
        %1423 = vperm.xlu0 %1422, %v1415
        %v1424 = vpop.permute.xlu0 %1423
        %v1427 = vsel %vm552, %v1411, 0
        %v1430 = vsel %vm552, %v1412, 0
        %1432 = vmatpush.msra.mxu0 0.0
        %1433 = vmatpush.msra.mxu0 0.0
        %1434 = vmatpush.msra.mxu0 0.0
        %1435 = vmatpush.msra.mxu0 0.0
        %1436 = vmatpush.msra.mxu0 0.0
        %1437 = vmatpush.msra.mxu0 0.0
        %1438 = vmatpush.msra.mxu0 0.0
        %1439 = vmatpush.msra.mxu0 0.0
        %1440 = vmatpush.msra.mxu0 %v1409
        %1441 = vmatpush.msra.mxu0 %v1408
        %1442 = vmatpush.msra.mxu0 %v1407
        %1443 = vmatpush.msra.mxu0 %v1406
        %1444 = vmatpush.msra.mxu0 %v1405
        %1445 = vmatpush.msra.mxu0 %v1404
        %1446 = vmatpush.msra.mxu0 %v1403
        %1447 = vmatpush.msra.mxu0 %v1402
        %1448 = vmatmul.f32.gmra.mxu0 %v1427
        %v1449 = vpop.f32.mrf.mxu0
        %v1450 = vadd.f32 %v1419, %v1449
        %1451 = vmatmul.f32.gmra.mxu0 %v1430
        %v1452 = vpop.f32.mrf.mxu0
        %v1453 = vadd.f32 %v1424, %v1452
        %1454 = vdwg.mxu0
        %v1455 = vtanh.pop %v1450
        %1457 = vset.pattern.permute.xlu0 0
        %1458 = vperm.xlu0 %1457, %v1093
        %v1459 = vpop.permute.xlu0 %1458
        %v1461 = vmul.f32 %v1455, %v1459
        %v1462 = vsub.f32 %v1088, %v1453
        %v1463 = vmul.f32 %v1459, %v1462
        %v1464 = vsub.f32 0.0, %v1461
        %v1465 = vmul.f32 %v1464, 1.442695
        %v1466 = vpow.pop %v1465
        %v1467 = vmul.f32 %v1463, %v1466
        %v1468 = vadd.f32 %v1467, %v1099
        %v1469 = vadd.f32 %v1089, %v1461
        %v1470 = vld [vmem:[%s1] sm:$0xff]
        %v1471 = vld [vmem:[%s2] sm:$0xff]
        %1473 = vset.pattern.permute.xlu0 0
        %1474 = vperm.xlu0 %1473, %v1470
        %v1475 = vpop.permute.xlu0 %1474
        %v1477 = vmul.f32 %v1475, %v1468
        %v1478 = vld [vmem:[%s3] sm:$0xff]
        %v1479 = vld [vmem:[%s3 + $0x8] sm:$0xff]
        %v1480 = vld [vmem:[%s3 + $0x10] sm:$0xff]
        %v1481 = vld [vmem:[%s3 + $0x18] sm:$0xff]
        %v1482 = vld [vmem:[%s3 + $0x20] sm:$0xff]
        %v1483 = vld [vmem:[%s3 + $0x28] sm:$0xff]
        %v1484 = vld [vmem:[%s3 + $0x30] sm:$0xff]
        %v1485 = vld [vmem:[%s3 + $0x38] sm:$0xff]
        %v1486 = vld [vmem:[%s4] sm:$0xff]
        %v1487 = vld [vmem:[%s4 + $0x8] sm:$0xff]
        %v1488 = vld [vmem:[%s4 + $0x10] sm:$0xff]
        %v1489 = vld [vmem:[%s4 + $0x18] sm:$0xff]
        %v1490 = vld [vmem:[%s4 + $0x20] sm:$0xff]
        %v1491 = vld [vmem:[%s4 + $0x28] sm:$0xff]
        %v1492 = vld [vmem:[%s4 + $0x30] sm:$0xff]
        %v1493 = vld [vmem:[%s4 + $0x38] sm:$0xff]
        %1495 = vset.pattern.permute.xlu0 0
        %1496 = vperm.xlu0 %1495, %v1486
        %v1497 = vpop.permute.xlu0 %1496
        %1500 = vset.pattern.permute.xlu0 0
        %1501 = vperm.xlu0 %1500, %v1487
        %v1502 = vpop.permute.xlu0 %1501
        %1505 = vset.pattern.permute.xlu0 0
        %1506 = vperm.xlu0 %1505, %v1488
        %v1507 = vpop.permute.xlu0 %1506
        %1510 = vset.pattern.permute.xlu0 0
        %1511 = vperm.xlu0 %1510, %v1489
        %v1512 = vpop.permute.xlu0 %1511
        %1515 = vset.pattern.permute.xlu0 0
        %1516 = vperm.xlu0 %1515, %v1490
        %v1517 = vpop.permute.xlu0 %1516
        %1520 = vset.pattern.permute.xlu0 0
        %1521 = vperm.xlu0 %1520, %v1491
        %v1522 = vpop.permute.xlu0 %1521
        %1525 = vset.pattern.permute.xlu0 0
        %1526 = vperm.xlu0 %1525, %v1492
        %v1527 = vpop.permute.xlu0 %1526
        %1530 = vset.pattern.permute.xlu0 0
        %1531 = vperm.xlu0 %1530, %v1493
        %v1532 = vpop.permute.xlu0 %1531
        %v1535 = vsel %vm396, %v1478, 0
        %v1538 = vsel %vm396, %v1479, 0
        %v1541 = vsel %vm396, %v1480, 0
        %v1544 = vsel %vm396, %v1481, 0
        %v1547 = vsel %vm396, %v1482, 0
        %v1550 = vsel %vm396, %v1483, 0
        %v1553 = vsel %vm396, %v1484, 0
        %v1556 = vsel %vm396, %v1485, 0
        %1558 = vmatpush.msra.mxu0 0.0
        %1559 = vmatpush.msra.mxu0 0.0
        %1560 = vmatpush.msra.mxu0 0.0
        %1561 = vmatpush.msra.mxu0 0.0
        %1562 = vmatpush.msra.mxu0 0.0
        %1563 = vmatpush.msra.mxu0 0.0
        %1564 = vmatpush.msra.mxu0 0.0
        %1565 = vmatpush.msra.mxu0 0.0
        %1566 = vmatpush.msra.mxu0 0.0
        %1567 = vmatpush.msra.mxu0 0.0
        %1568 = vmatpush.msra.mxu0 0.0
        %1569 = vmatpush.msra.mxu0 0.0
        %1570 = vmatpush.msra.mxu0 0.0
        %1571 = vmatpush.msra.mxu0 0.0
        %1572 = vmatpush.msra.mxu0 0.0
        %1573 = vmatpush.msra.mxu0 %v1477
        %1574 = vmatmul.f32.gmra.mxu0 %v1535
        %v1575 = vpop.f32.mrf.mxu0
        %v1576 = vadd.f32 %v1497, %v1575
        %1577 = vmatmul.f32.gmra.mxu0 %v1538
        %v1578 = vpop.f32.mrf.mxu0
        %v1579 = vadd.f32 %v1502, %v1578
        %1580 = vmatmul.f32.gmra.mxu0 %v1541
        %v1581 = vpop.f32.mrf.mxu0
        %v1582 = vadd.f32 %v1507, %v1581
        %1583 = vmatmul.f32.gmra.mxu0 %v1544
        %v1584 = vpop.f32.mrf.mxu0
        %v1585 = vadd.f32 %v1512, %v1584
        %1586 = vmatmul.f32.gmra.mxu0 %v1547
        %v1587 = vpop.f32.mrf.mxu0
        %v1588 = vadd.f32 %v1517, %v1587
        %1589 = vmatmul.f32.gmra.mxu0 %v1550
        %v1590 = vpop.f32.mrf.mxu0
        %v1591 = vadd.f32 %v1522, %v1590
        %1592 = vmatmul.f32.gmra.mxu0 %v1553
        %v1593 = vpop.f32.mrf.mxu0
        %v1594 = vadd.f32 %v1527, %v1593
        %1595 = vmatmul.f32.gmra.mxu0 %v1556
        %v1596 = vpop.f32.mrf.mxu0
        %v1597 = vadd.f32 %v1532, %v1596
        %1598 = vdwg.mxu0
        %v1599 = vmax.f32 %v1576, 0.0
        %v1600 = vmax.f32 %v1579, 0.0
        %v1601 = vmax.f32 %v1582, 0.0
        %v1602 = vmax.f32 %v1585, 0.0
        %v1603 = vmax.f32 %v1588, 0.0
        %v1604 = vmax.f32 %v1591, 0.0
        %v1605 = vmax.f32 %v1594, 0.0
        %v1606 = vmax.f32 %v1597, 0.0
        %v1607 = vmin.f32 %v1576, 0.0
        %v1608 = vmin.f32 %v1579, 0.0
        %v1609 = vmin.f32 %v1582, 0.0
        %v1610 = vmin.f32 %v1585, 0.0
        %v1611 = vmin.f32 %v1588, 0.0
        %v1612 = vmin.f32 %v1591, 0.0
        %v1613 = vmin.f32 %v1594, 0.0
        %v1614 = vmin.f32 %v1597, 0.0
        %v1615 = vmul.f32 %v1607, 0.01
        %v1616 = vmul.f32 %v1608, 0.01
        %v1617 = vmul.f32 %v1609, 0.01
        %v1618 = vmul.f32 %v1610, 0.01
        %v1619 = vmul.f32 %v1611, 0.01
        %v1620 = vmul.f32 %v1612, 0.01
        %v1621 = vmul.f32 %v1613, 0.01
        %v1622 = vmul.f32 %v1614, 0.01
        %v1623 = vadd.f32 %v1599, %v1615
        %v1624 = vadd.f32 %v1600, %v1616
        %v1625 = vadd.f32 %v1601, %v1617
        %v1626 = vadd.f32 %v1602, %v1618
        %v1627 = vadd.f32 %v1603, %v1619
        %v1628 = vadd.f32 %v1604, %v1620
        %v1629 = vadd.f32 %v1605, %v1621
        %v1630 = vadd.f32 %v1606, %v1622
        %v1631 = vld [vmem:[%s5] sm:$0xff]
        %v1632 = vld [vmem:[%s5 + $0x8] sm:$0xff]
        %v1633 = vld [vmem:[%s5 + $0x10] sm:$0xff]
        %v1634 = vld [vmem:[%s5 + $0x18] sm:$0xff]
        %v1635 = vld [vmem:[%s5 + $0x20] sm:$0xff]
        %v1636 = vld [vmem:[%s5 + $0x28] sm:$0xff]
        %v1637 = vld [vmem:[%s5 + $0x30] sm:$0xff]
        %v1638 = vld [vmem:[%s5 + $0x38] sm:$0xff]
        %v1639 = vld [vmem:[%s6] sm:$0xff]
        %v1640 = vld [vmem:[%s6 + $0x8] sm:$0xff]
        %v1641 = vld [vmem:[%s6 + $0x10] sm:$0xff]
        %v1642 = vld [vmem:[%s6 + $0x18] sm:$0xff]
        %v1643 = vld [vmem:[%s6 + $0x20] sm:$0xff]
        %v1644 = vld [vmem:[%s6 + $0x28] sm:$0xff]
        %v1645 = vld [vmem:[%s6 + $0x30] sm:$0xff]
        %v1646 = vld [vmem:[%s6 + $0x38] sm:$0xff]
        %1648 = vset.pattern.permute.xlu0 0
        %1649 = vperm.xlu0 %1648, %v1639
        %v1650 = vpop.permute.xlu0 %1649
        %1653 = vset.pattern.permute.xlu0 0
        %1654 = vperm.xlu0 %1653, %v1640
        %v1655 = vpop.permute.xlu0 %1654
        %1658 = vset.pattern.permute.xlu0 0
        %1659 = vperm.xlu0 %1658, %v1641
        %v1660 = vpop.permute.xlu0 %1659
        %1663 = vset.pattern.permute.xlu0 0
        %1664 = vperm.xlu0 %1663, %v1642
        %v1665 = vpop.permute.xlu0 %1664
        %1668 = vset.pattern.permute.xlu0 0
        %1669 = vperm.xlu0 %1668, %v1643
        %v1670 = vpop.permute.xlu0 %1669
        %1673 = vset.pattern.permute.xlu0 0
        %1674 = vperm.xlu0 %1673, %v1644
        %v1675 = vpop.permute.xlu0 %1674
        %1678 = vset.pattern.permute.xlu0 0
        %1679 = vperm.xlu0 %1678, %v1645
        %v1680 = vpop.permute.xlu0 %1679
        %1683 = vset.pattern.permute.xlu0 0
        %1684 = vperm.xlu0 %1683, %v1646
        %v1685 = vpop.permute.xlu0 %1684
        %v1688 = vsel %vm552, %v1631, 0
        %v1691 = vsel %vm552, %v1632, 0
        %v1694 = vsel %vm552, %v1633, 0
        %v1697 = vsel %vm552, %v1634, 0
        %v1700 = vsel %vm552, %v1635, 0
        %v1703 = vsel %vm552, %v1636, 0
        %v1706 = vsel %vm552, %v1637, 0
        %v1709 = vsel %vm552, %v1638, 0
        %1711 = vmatpush.msra.mxu0 0.0
        %1712 = vmatpush.msra.mxu0 0.0
        %1713 = vmatpush.msra.mxu0 0.0
        %1714 = vmatpush.msra.mxu0 0.0
        %1715 = vmatpush.msra.mxu0 0.0
        %1716 = vmatpush.msra.mxu0 0.0
        %1717 = vmatpush.msra.mxu0 0.0
        %1718 = vmatpush.msra.mxu0 0.0
        %1719 = vmatpush.msra.mxu0 %v1630
        %1720 = vmatpush.msra.mxu0 %v1629
        %1721 = vmatpush.msra.mxu0 %v1628
        %1722 = vmatpush.msra.mxu0 %v1627
        %1723 = vmatpush.msra.mxu0 %v1626
        %1724 = vmatpush.msra.mxu0 %v1625
        %1725 = vmatpush.msra.mxu0 %v1624
        %1726 = vmatpush.msra.mxu0 %v1623
        %1727 = vmatmul.f32.gmra.mxu0 %v1688
        %v1728 = vpop.f32.mrf.mxu0
        %v1729 = vadd.f32 %v1650, %v1728
        %1730 = vmatmul.f32.gmra.mxu0 %v1691
        %v1731 = vpop.f32.mrf.mxu0
        %v1732 = vadd.f32 %v1655, %v1731
        %1733 = vmatmul.f32.gmra.mxu0 %v1694
        %v1734 = vpop.f32.mrf.mxu0
        %v1735 = vadd.f32 %v1660, %v1734
        %1736 = vmatmul.f32.gmra.mxu0 %v1697
        %v1737 = vpop.f32.mrf.mxu0
        %v1738 = vadd.f32 %v1665, %v1737
        %1739 = vmatmul.f32.gmra.mxu0 %v1700
        %v1740 = vpop.f32.mrf.mxu0
        %v1741 = vadd.f32 %v1670, %v1740
        %1742 = vmatmul.f32.gmra.mxu0 %v1703
        %v1743 = vpop.f32.mrf.mxu0
        %v1744 = vadd.f32 %v1675, %v1743
        %1745 = vmatmul.f32.gmra.mxu0 %v1706
        %v1746 = vpop.f32.mrf.mxu0
        %v1747 = vadd.f32 %v1680, %v1746
        %1748 = vmatmul.f32.gmra.mxu0 %v1709
        %v1749 = vpop.f32.mrf.mxu0
        %v1750 = vadd.f32 %v1685, %v1749
        %1751 = vdwg.mxu0
        %v1752 = vmax.f32 %v1729, 0.0
        %v1753 = vmax.f32 %v1732, 0.0
        %v1754 = vmax.f32 %v1735, 0.0
        %v1755 = vmax.f32 %v1738, 0.0
        %v1756 = vmax.f32 %v1741, 0.0
        %v1757 = vmax.f32 %v1744, 0.0
        %v1758 = vmax.f32 %v1747, 0.0
        %v1759 = vmax.f32 %v1750, 0.0
        %v1760 = vmin.f32 %v1729, 0.0
        %v1761 = vmin.f32 %v1732, 0.0
        %v1762 = vmin.f32 %v1735, 0.0
        %v1763 = vmin.f32 %v1738, 0.0
        %v1764 = vmin.f32 %v1741, 0.0
        %v1765 = vmin.f32 %v1744, 0.0
        %v1766 = vmin.f32 %v1747, 0.0
        %v1767 = vmin.f32 %v1750, 0.0
        %v1768 = vmul.f32 %v1760, 0.01
        %v1769 = vmul.f32 %v1761, 0.01
        %v1770 = vmul.f32 %v1762, 0.01
        %v1771 = vmul.f32 %v1763, 0.01
        %v1772 = vmul.f32 %v1764, 0.01
        %v1773 = vmul.f32 %v1765, 0.01
        %v1774 = vmul.f32 %v1766, 0.01
        %v1775 = vmul.f32 %v1767, 0.01
        %v1776 = vadd.f32 %v1752, %v1768
        %v1777 = vadd.f32 %v1753, %v1769
        %v1778 = vadd.f32 %v1754, %v1770
        %v1779 = vadd.f32 %v1755, %v1771
        %v1780 = vadd.f32 %v1756, %v1772
        %v1781 = vadd.f32 %v1757, %v1773
        %v1782 = vadd.f32 %v1758, %v1774
        %v1783 = vadd.f32 %v1759, %v1775
        %v1784 = vld [vmem:[%s7] sm:$0xff]
        %v1785 = vld [vmem:[%s7 + $0x8] sm:$0xff]
        %v1786 = vld [vmem:[%s8] sm:$0xff]
        %v1787 = vld [vmem:[%s8 + $0x8] sm:$0xff]
        %1789 = vset.pattern.permute.xlu0 0
        %1790 = vperm.xlu0 %1789, %v1786
        %v1791 = vpop.permute.xlu0 %1790
        %1794 = vset.pattern.permute.xlu0 0
        %1795 = vperm.xlu0 %1794, %v1787
        %v1796 = vpop.permute.xlu0 %1795
        %v1799 = vsel %vm552, %v1784, 0
        %v1802 = vsel %vm552, %v1785, 0
        %1804 = vmatpush.msra.mxu0 0.0
        %1805 = vmatpush.msra.mxu0 0.0
        %1806 = vmatpush.msra.mxu0 0.0
        %1807 = vmatpush.msra.mxu0 0.0
        %1808 = vmatpush.msra.mxu0 0.0
        %1809 = vmatpush.msra.mxu0 0.0
        %1810 = vmatpush.msra.mxu0 0.0
        %1811 = vmatpush.msra.mxu0 0.0
        %1812 = vmatpush.msra.mxu0 %v1783
        %1813 = vmatpush.msra.mxu0 %v1782
        %1814 = vmatpush.msra.mxu0 %v1781
        %1815 = vmatpush.msra.mxu0 %v1780
        %1816 = vmatpush.msra.mxu0 %v1779
        %1817 = vmatpush.msra.mxu0 %v1778
        %1818 = vmatpush.msra.mxu0 %v1777
        %1819 = vmatpush.msra.mxu0 %v1776
        %1820 = vmatmul.f32.gmra.mxu0 %v1799
        %v1821 = vpop.f32.mrf.mxu0
        %v1822 = vadd.f32 %v1791, %v1821
        %1823 = vmatmul.f32.gmra.mxu0 %v1802
        %v1824 = vpop.f32.mrf.mxu0
        %v1825 = vadd.f32 %v1796, %v1824
        %1826 = vdwg.mxu0
        %v1827 = vtanh.pop %v1822
        %1829 = vset.pattern.permute.xlu0 0
        %1830 = vperm.xlu0 %1829, %v1471
        %v1831 = vpop.permute.xlu0 %1830
        %v1833 = vmul.f32 %v1827, %v1831
        %v1834 = vsub.f32 %v1468, %v1825
        %v1835 = vmul.f32 %v1831, %v1834
        %v1836 = vsub.f32 0.0, %v1833
        %v1837 = vmul.f32 %v1836, 1.442695
        %v1838 = vpow.pop %v1837
        %v1839 = vmul.f32 %v1835, %v1838
        %v1840 = vadd.f32 %v1839, %v1477
        %v1841 = vadd.f32 %v1469, %v1833
        %v1842 = vmul.f32 %v1840, -0.5
        %v1843 = vmul.f32 %v1842, %v1840
        %v1844 = vsub.f32 %v1843, %v1841
        %v1845 = vrot.slane %v1844, 4
        %v1846 = vadd.f32 %v1844, %v1845
        %v1847 = vrot.slane %v1846, 2
        %v1848 = vadd.f32 %v1846, %v1847
        %v1849 = vrot.slane %v1848, 1
        %v1850 = vadd.f32 %v1848, %v1849
        %v1851 = vsub.f32 %v1850, 7.351508
        %1852 = vst [vmem:[%s322] sm:$0x1] %v1851
        %s1853 = sand.u32 %s225, 1
        %s1854 = scalar_lea.sflag [#allocation3], %s1853
        %s1855 = sand.u32 %s225, 1
        %s1856 = scalar_lea.vmem [#allocation2], %s1855
        // Predicated region
        $region57: #{realnvp_log_prob.1} parent=55 // pred_check
          %p1857 = pneg %p235
        $region58: #{realnvp_log_prob.1} parent=55 // pred_check_branch
          %1859 = sbr.rel (%p1857) target = $region60
        $region59: #{realnvp_log_prob.1} parent=55 // pred_region
          %1861 = vsyncadd %s1854, 0
          %s1862 = scalar_lea.hbm %s9, %s23
          %s1864 = sshll.u32 %s1856, 4
          %s1865 = int_to_ptr.vmem [resolvable:$true] %s1864
          %s1866 = sshll.u32 %s1862, 4
          %s1867 = int_to_ptr.hbm [resolvable:$true] %s1866
          %1869 = dma.vmem_to_hbm [thread:$0]  %s1865, 16, %s1867, %s1854
        $region60: #{realnvp_log_prob.1} parent=55 // pred_fallthru
          _
      $region56: #{realnvp_log_prob.1} parent=5 // pred_fallthru
        _
      %p1870 = scmp.le.s32.totalorder 2, %s18
      // Predicated region
      $region61: #{realnvp_log_prob.1} parent=5 // pred_check
        %p1871 = pneg %p1870
      $region62: #{realnvp_log_prob.1} parent=5 // pred_check_branch
        %1873 = sbr.rel (%p1871) target = $region64
      $region63: #{realnvp_log_prob.1} parent=5 // pred_region
        %s1874 = ssub.s32 %s18, 2
        // Predicated region
        $region65: #{realnvp_log_prob.1} parent=63 // pred_check
          %p1875 = pneg %p241
        $region66: #{realnvp_log_prob.1} parent=63 // pred_check_branch
          %1877 = sbr.rel (%p1875) target = $region68
        $region67: #{realnvp_log_prob.1} parent=63 // pred_region
          %s1878 = sand.u32 %s226, 1
          %s1879 = scalar_lea.sflag [#allocation3], %s1878
          %s1880 = sand.u32 %s226, 1
          %s1881 = scalar_lea.vmem [#allocation2], %s1880
          %1883 = dma.done %s1879, 16
        $region68: #{realnvp_log_prob.1} parent=63 // pred_fallthru
          _
      $region64: #{realnvp_log_prob.1} parent=5 // pred_fallthru
        _
    $region6: #{realnvp_log_prob.1} parent=1 // loop_footer
      %s22 = sadd.s32 1, %s18
    $region7: #{realnvp_log_prob.1} parent=1 // loop_footer_branch
      %17 = sbr.rel target = $region3
    $region8: #{realnvp_log_prob.1} parent=1 // loop_exit
      _
    %1884 = vsyncpa [#allocation3], 1
    %s1885 = scalar_lea.sflag [#allocation3], 1
    %1886 = vsyncpa %s1885, 1

</llo_original>
